<compile_context>
chip_gen: v7x
topology: tpu7x:2x2x1
jax: 0.10.0
libtpu: 0.0.40
codegen_flags: <defaults>
</compile_context>

<pallas_src>
import functools

import jax
import jax.numpy as jnp
from jax.experimental import pallas as pl
from jax.experimental.pallas import tpu as pltpu


def _round_up(x, m):
    return (x + m - 1) // m * m


def _cdiv(a, b):
    return (a + b - 1) // b


def mlp_kernel(x_ref, w1_ref, b1_ref, w2_ref, b2_ref, w3_ref, b3_ref, o_ref):
    """fc1 -> tanh -> fc2 -> tanh -> fc3 on one batch tile (operands in VMEM)."""
    cdt = w1_ref.dtype  # MXU input dtype (bf16); accumulation stays f32
    # fc1 + tanh
    h1 = jnp.dot(x_ref[...], w1_ref[...], preferred_element_type=jnp.float32)
    h1 = jnp.tanh(h1 + b1_ref[...]).astype(cdt)
    # fc2 + tanh
    h2 = jnp.dot(h1, w2_ref[...], preferred_element_type=jnp.float32)
    h2 = jnp.tanh(h2 + b2_ref[...]).astype(cdt)
    # fc3 (no activation)
    out = jnp.dot(h2, w3_ref[...], preferred_element_type=jnp.float32)
    o_ref[...] = (out + b3_ref[...]).astype(o_ref.dtype)


@functools.partial(jax.jit,
                   static_argnames=("batch_tile", "num_cores", "compute_dtype"))
def mlp_forward(x, w1, b1, w2, b2, w3, b3, *, batch_tile=1024, num_cores=1,
                compute_dtype=jnp.bfloat16):
    """x: [B, in]; w*: [in, out] (transpose of torch Linear.weight); b*: [out]."""
    B, in_sz = x.shape
    h1_sz = w1.shape[1]
    h2_sz = w2.shape[1]
    out_sz = w3.shape[1]

    cdt = jnp.dtype(compute_dtype)
    f32 = jnp.float32

    # Sub-32-bit dtypes pack along sublanes: bf16 holds 16 rows per vreg.
    row_align = 16 if cdt.itemsize == 2 else 8

    # One batch tile per TensorCore unless the batch is so large that tiles
    # would exceed `batch_tile` rows; keep the tile count a multiple of
    # num_cores so 2-TC chips get equal work per core.
    n_tiles = max(num_cores, _cdiv(B, batch_tile))
    n_tiles = _round_up(n_tiles, num_cores)
    bt = _round_up(_cdiv(B, n_tiles), row_align)
    Bp = bt * n_tiles

    xc = x.astype(cdt)
    if Bp != B:  # only pads (and later slices) when batch isn't tile-aligned
        xc = jnp.pad(xc, ((0, Bp - B), (0, 0)))

    # No lane padding: block shapes equal the full feature dims, so there are
    # no extra HBM pad/slice passes and no tanh work on padding lanes.
    w1c = w1.astype(cdt)
    w2c = w2.astype(cdt)
    w3c = w3.astype(cdt)
    b1r = b1.reshape(1, h1_sz).astype(f32)
    b2r = b2.reshape(1, h2_sz).astype(f32)
    b3r = b3.reshape(1, out_sz).astype(f32)

    # Honest scheduler hint with real (unpadded) dims.
    cost = pl.CostEstimate(
        flops=2 * Bp * (in_sz * h1_sz + h1_sz * h2_sz + h2_sz * out_sz),
        transcendentals=Bp * (h1_sz + h2_sz),
        bytes_accessed=(cdt.itemsize * (Bp * in_sz + in_sz * h1_sz
                                        + h1_sz * h2_sz + h2_sz * out_sz)
                        + 4 * (Bp * out_sz + h1_sz + h2_sz + out_sz)),
    )

    # Block-invariant operands (weights/biases): same block every grid step.
    inv = lambda shape: pl.BlockSpec(shape, lambda i: (0, 0))

    out = pl.pallas_call(
        mlp_kernel,
        out_shape=jax.ShapeDtypeStruct((Bp, out_sz), f32),
        grid_spec=pltpu.PrefetchScalarGridSpec(
            num_scalar_prefetch=0,
            grid=(n_tiles,),
            in_specs=[
                pl.BlockSpec((bt, in_sz), lambda i: (i, 0)),   # x tile
                inv((in_sz, h1_sz)),   # w1
                inv((1, h1_sz)),       # b1
                inv((h1_sz, h2_sz)),   # w2
                inv((1, h2_sz)),       # b2
                inv((h2_sz, out_sz)),  # w3
                inv((1, out_sz)),      # b3
            ],
            out_specs=pl.BlockSpec((bt, out_sz), lambda i: (i, 0)),
        ),
        compiler_params=pltpu.CompilerParams(
            # Shards the batch axis across TensorCores on multi-TC chips;
            # harmless no-op when grid == (1,).
            dimension_semantics=("parallel",),
        ),
        cost_estimate=cost,
    )(xc, w1c, b1r, w2c, b2r, w3c, b3r)

    if Bp != B:
        out = out[:B]
    return out


if __name__ == "__main__":
    # Shapes consistent with the module: Linear(input->hidden->hidden2->output).
    batch = 512
    input_size = 32
    hidden_size = 64
    hidden_size2 = 32
    output_size = 16

    key = jax.random.PRNGKey(0)
    x = jax.random.normal(key, (batch, input_size), dtype=jnp.float32)

    # Deterministic parameters: all 0.1, matching fc*.weight.data.fill_(0.1).
    # Weights stored as [in, out] (transpose of PyTorch's [out, in]).
    w1 = jnp.full((input_size, hidden_size), 0.1, dtype=jnp.float32)
    b1 = jnp.full((hidden_size,), 0.1, dtype=jnp.float32)
    w2 = jnp.full((hidden_size, hidden_size2), 0.1, dtype=jnp.float32)
    b2 = jnp.full((hidden_size2,), 0.1, dtype=jnp.float32)
    w3 = jnp.full((hidden_size2, output_size), 0.1, dtype=jnp.float32)
    b3 = jnp.full((output_size,), 0.1, dtype=jnp.float32)

    # Chips with 2 TensorCores per device (megacore v4/v5p, v7x): one batch
    # tile per core. Single-TC chips (v5e/v6e): one full-batch tile, grid=(1,).
    kind = jax.devices()[0].device_kind.lower()
    num_cores = 2 if any(t in kind for t in ("v4", "v5p", "v7", "tpu7")) else 1

    compute_dtype = jnp.bfloat16  # bf16 MXU inputs on every TPU generation

    out = mlp_forward(x, w1, b1, w2, b2, w3, b3,
                      batch_tile=1024, num_cores=num_cores,
                      compute_dtype=compute_dtype)
    out = jax.block_until_ready(out)

    # Pure-JAX reference mirroring the kernel's compute dtype (operands rounded
    # to compute_dtype, accumulation/bias/tanh in f32) so the check isolates
    # kernel correctness from the intentional bf16 quantization.
    def ref_forward(cdt):
        up = lambda a: a.astype(cdt).astype(jnp.float32)
        h1 = jnp.tanh(up(x) @ up(w1) + b1)
        h2 = jnp.tanh(up(h1) @ up(w2) + b2)
        return up(h2) @ up(w3) + b3

    ref = ref_forward(compute_dtype)
    tol = 2e-2 if jnp.dtype(compute_dtype).itemsize == 2 else 1e-4
    assert out.shape == (batch, output_size)
    assert jnp.allclose(out, ref, atol=tol, rtol=tol), float(jnp.max(jnp.abs(out - ref)))

    print("KERNEL_OK")
</pallas_src>

<mosaic_0001>
module attributes {stable_mosaic.version = 11 : i64} {
  func.func @mlp_kernel(%arg0: i32, %arg1: memref<512x32xbf16, #tpu.memory_space<vmem>>, %arg2: memref<32x64xbf16, #tpu.memory_space<vmem>>, %arg3: memref<1x64xf32, #tpu.memory_space<vmem>>, %arg4: memref<64x32xbf16, #tpu.memory_space<vmem>>, %arg5: memref<1x32xf32, #tpu.memory_space<vmem>>, %arg6: memref<32x16xbf16, #tpu.memory_space<vmem>>, %arg7: memref<1x16xf32, #tpu.memory_space<vmem>>, %arg8: memref<512x16xf32, #tpu.memory_space<vmem>>) attributes {dimension_semantics = [#tpu.dimension_semantics<parallel>], iteration_bounds = array<i64: 1>, scalar_prefetch = 0 : i64, scratch_operands = 0 : i64, tpu.core_type = #tpu.core_type<tc>, window_params = [{transform_indices = @transform_0, window_bounds = array<i64: 512, 32>}, {pipeline_mode = #tpu.pipeline_mode<synchronous>, transform_indices = @transform_1, window_bounds = array<i64: 32, 64>}, {pipeline_mode = #tpu.pipeline_mode<synchronous>, transform_indices = @transform_2, window_bounds = array<i64: 1, 64>}, {pipeline_mode = #tpu.pipeline_mode<synchronous>, transform_indices = @transform_3, window_bounds = array<i64: 64, 32>}, {pipeline_mode = #tpu.pipeline_mode<synchronous>, transform_indices = @transform_4, window_bounds = array<i64: 1, 32>}, {pipeline_mode = #tpu.pipeline_mode<synchronous>, transform_indices = @transform_5, window_bounds = array<i64: 32, 16>}, {pipeline_mode = #tpu.pipeline_mode<synchronous>, transform_indices = @transform_6, window_bounds = array<i64: 1, 16>}, {transform_indices = @transform_7, window_bounds = array<i64: 512, 16>}]} {
    %c0 = arith.constant 0 : index
    %c0_0 = arith.constant 0 : index
    %0 = vector.load %arg1[%c0, %c0_0] : memref<512x32xbf16, #tpu.memory_space<vmem>>, vector<512x32xbf16>
    %c0_1 = arith.constant 0 : index
    %c0_2 = arith.constant 0 : index
    %1 = vector.load %arg2[%c0_1, %c0_2] : memref<32x64xbf16, #tpu.memory_space<vmem>>, vector<32x64xbf16>
    %cst = arith.constant dense<0.000000e+00> : vector<512x64xf32>
    %2 = tpu.matmul %0, %1, %cst {dimension_numbers = #tpu.dot_dimension_numbers<[1], [0], [0], [1], [0, 0, 1, 1], [], []>} : vector<512x32xbf16>, vector<32x64xbf16>, vector<512x64xf32> -> vector<512x64xf32>
    %c0_3 = arith.constant 0 : index
    %c0_4 = arith.constant 0 : index
    %3 = vector.load %arg3[%c0_3, %c0_4] : memref<1x64xf32, #tpu.memory_space<vmem>>, vector<1x64xf32>
    %4 = vector.broadcast %3 : vector<1x64xf32> to vector<512x64xf32>
    %5 = arith.addf %2, %4 : vector<512x64xf32>
    %6 = math.tanh %5 : vector<512x64xf32>
    %7 = arith.truncf %6 : vector<512x64xf32> to vector<512x64xbf16>
    %c0_5 = arith.constant 0 : index
    %c0_6 = arith.constant 0 : index
    %8 = vector.load %arg4[%c0_5, %c0_6] : memref<64x32xbf16, #tpu.memory_space<vmem>>, vector<64x32xbf16>
    %cst_7 = arith.constant dense<0.000000e+00> : vector<512x32xf32>
    %9 = tpu.matmul %7, %8, %cst_7 {dimension_numbers = #tpu.dot_dimension_numbers<[1], [0], [0], [1], [0, 0, 1, 1], [], []>} : vector<512x64xbf16>, vector<64x32xbf16>, vector<512x32xf32> -> vector<512x32xf32>
    %c0_8 = arith.constant 0 : index
    %c0_9 = arith.constant 0 : index
    %10 = vector.load %arg5[%c0_8, %c0_9] : memref<1x32xf32, #tpu.memory_space<vmem>>, vector<1x32xf32>
    %11 = vector.broadcast %10 : vector<1x32xf32> to vector<512x32xf32>
    %12 = arith.addf %9, %11 : vector<512x32xf32>
    %13 = math.tanh %12 : vector<512x32xf32>
    %14 = arith.truncf %13 : vector<512x32xf32> to vector<512x32xbf16>
    %c0_10 = arith.constant 0 : index
    %c0_11 = arith.constant 0 : index
    %15 = vector.load %arg6[%c0_10, %c0_11] : memref<32x16xbf16, #tpu.memory_space<vmem>>, vector<32x16xbf16>
    %cst_12 = arith.constant dense<0.000000e+00> : vector<512x16xf32>
    %16 = tpu.matmul %14, %15, %cst_12 {dimension_numbers = #tpu.dot_dimension_numbers<[1], [0], [0], [1], [0, 0, 1, 1], [], []>} : vector<512x32xbf16>, vector<32x16xbf16>, vector<512x16xf32> -> vector<512x16xf32>
    %c0_13 = arith.constant 0 : index
    %c0_14 = arith.constant 0 : index
    %17 = vector.load %arg7[%c0_13, %c0_14] : memref<1x16xf32, #tpu.memory_space<vmem>>, vector<1x16xf32>
    %18 = vector.broadcast %17 : vector<1x16xf32> to vector<512x16xf32>
    %19 = arith.addf %16, %18 : vector<512x16xf32>
    %c0_15 = arith.constant 0 : index
    %c0_16 = arith.constant 0 : index
    %20 = vector.load %arg8[%c0_15, %c0_16] : memref<512x16xf32, #tpu.memory_space<vmem>>, vector<512x16xf32>
    tpu.vector_store %arg8[%c0_15, %c0_16], %19 {strides = array<i32>} : memref<512x16xf32, #tpu.memory_space<vmem>>, vector<512x16xf32>,
    return
  }
  func.func @transform_0(%arg0: i32) -> (i32, i32) {
    %c0_i32 = arith.constant 0 : i32
    %c0_i32_0 = arith.constant 0 : i32
    return %arg0, %c0_i32 : i32, i32
  }
  func.func @transform_1(%arg0: i32) -> (i32, i32) {
    %c0_i32 = arith.constant 0 : i32
    %c0_i32_0 = arith.constant 0 : i32
    %c0_i32_1 = arith.constant 0 : i32
    return %c0_i32, %c0_i32_0 : i32, i32
  }
  func.func @transform_2(%arg0: i32) -> (i32, i32) {
    %c0_i32 = arith.constant 0 : i32
    %c0_i32_0 = arith.constant 0 : i32
    %c0_i32_1 = arith.constant 0 : i32
    return %c0_i32, %c0_i32_0 : i32, i32
  }
  func.func @transform_3(%arg0: i32) -> (i32, i32) {
    %c0_i32 = arith.constant 0 : i32
    %c0_i32_0 = arith.constant 0 : i32
    %c0_i32_1 = arith.constant 0 : i32
    return %c0_i32, %c0_i32_0 : i32, i32
  }
  func.func @transform_4(%arg0: i32) -> (i32, i32) {
    %c0_i32 = arith.constant 0 : i32
    %c0_i32_0 = arith.constant 0 : i32
    %c0_i32_1 = arith.constant 0 : i32
    return %c0_i32, %c0_i32_0 : i32, i32
  }
  func.func @transform_5(%arg0: i32) -> (i32, i32) {
    %c0_i32 = arith.constant 0 : i32
    %c0_i32_0 = arith.constant 0 : i32
    %c0_i32_1 = arith.constant 0 : i32
    return %c0_i32, %c0_i32_0 : i32, i32
  }
  func.func @transform_6(%arg0: i32) -> (i32, i32) {
    %c0_i32 = arith.constant 0 : i32
    %c0_i32_0 = arith.constant 0 : i32
    %c0_i32_1 = arith.constant 0 : i32
    return %c0_i32, %c0_i32_0 : i32, i32
  }
  func.func @transform_7(%arg0: i32) -> (i32, i32) {
    %c0_i32 = arith.constant 0 : i32
    %c0_i32_0 = arith.constant 0 : i32
    return %arg0, %c0_i32 : i32, i32
  }
}

</mosaic_0001>

<llo_original>
// kernel: mlp_forward.1
$region0: #{mlp_forward.1}
  #allocation0 [shape = 'u32[]', space=smem, size = 0x4, offset = 0x4, fixed_abs, tag = 'smem constant byte address 0x4 - core index']
  #allocation1 [shape = 'u32[144,128]{1,0:T(1,128)}', space=vmem, size = 0x12000, scoped, tag = 'internal scratch']
  %s0 = inlined_call_operand.vmem [shape: bf16[512,32], index: 0, kind: input, shape index: {}]
  %s1 = inlined_call_operand.vmem [shape: bf16[32,64], index: 1, kind: input, shape index: {}]
  %s2 = inlined_call_operand.vmem [shape: f32[1,64], index: 2, kind: input, shape index: {}]
  %s3 = inlined_call_operand.vmem [shape: bf16[64,32], index: 3, kind: input, shape index: {}]
  %s4 = inlined_call_operand.vmem [shape: f32[1,32], index: 4, kind: input, shape index: {}]
  %s5 = inlined_call_operand.vmem [shape: bf16[32,16], index: 5, kind: input, shape index: {}]
  %s6 = inlined_call_operand.vmem [shape: f32[1,16], index: 6, kind: input, shape index: {}]
  %s7 = inlined_call_operand.vmem [shape: f32[512,16], index: 7, kind: output, shape index: {}]
  %s8 = sld [smem:[#allocation0]]
  $region38: #{mlp_forward.1} parent=0
    _
  %s10 = ssub.s32 1, %s8
  %s11 = scalar_select 0, %s10, %s8
  // Predicated region
  $region2: #{mlp_forward.1} parent=0 // pred_check
    _
  $region3: #{mlp_forward.1} parent=0 // pred_check_branch
    %13 = sbr.rel (0) target = $region5
  $region4: #{mlp_forward.1} parent=0 // pred_region
    _
  $region5: #{mlp_forward.1} parent=0 // pred_fallthru
    _
  // Predicated region
  $region6: #{mlp_forward.1} parent=0 // pred_check
    _
  $region7: #{mlp_forward.1} parent=0 // pred_check_branch
    %15 = sbr.rel (0) target = $region9
  $region8: #{mlp_forward.1} parent=0 // pred_region
    _
  $region9: #{mlp_forward.1} parent=0 // pred_fallthru
    _
  // Predicated region
  $region10: #{mlp_forward.1} parent=0 // pred_check
    _
  $region11: #{mlp_forward.1} parent=0 // pred_check_branch
    %17 = sbr.rel (0) target = $region13
  $region12: #{mlp_forward.1} parent=0 // pred_region
    _
  $region13: #{mlp_forward.1} parent=0 // pred_fallthru
    _
  // Predicated region
  $region14: #{mlp_forward.1} parent=0 // pred_check
    _
  $region15: #{mlp_forward.1} parent=0 // pred_check_branch
    %19 = sbr.rel (0) target = $region17
  $region16: #{mlp_forward.1} parent=0 // pred_region
    _
  $region17: #{mlp_forward.1} parent=0 // pred_fallthru
    _
  // Predicated region
  $region18: #{mlp_forward.1} parent=0 // pred_check
    _
  $region19: #{mlp_forward.1} parent=0 // pred_check_branch
    %21 = sbr.rel (0) target = $region21
  $region20: #{mlp_forward.1} parent=0 // pred_region
    _
  $region21: #{mlp_forward.1} parent=0 // pred_fallthru
    _
  // Predicated region
  $region22: #{mlp_forward.1} parent=0 // pred_check
    _
  $region23: #{mlp_forward.1} parent=0 // pred_check_branch
    %23 = sbr.rel (0) target = $region25
  $region24: #{mlp_forward.1} parent=0 // pred_region
    _
  $region25: #{mlp_forward.1} parent=0 // pred_fallthru
    _
  // Predicated region
  $region26: #{mlp_forward.1} parent=0 // pred_check
    _
  $region27: #{mlp_forward.1} parent=0 // pred_check_branch
    %25 = sbr.rel (0) target = $region29
  $region28: #{mlp_forward.1} parent=0 // pred_region
    _
  $region29: #{mlp_forward.1} parent=0 // pred_fallthru
    _
  %v27 = vld [vmem:[%s0] sm:$0xf]
  %v28 = vld [vmem:[%s0 + $0x4] sm:$0xf]
  %v29 = vld [vmem:[%s0 + $0x8] sm:$0xf]
  %v30 = vld [vmem:[%s0 + $0xc] sm:$0xf]
  %v31 = vld [vmem:[%s0 + $0x10] sm:$0xf]
  %v32 = vld [vmem:[%s0 + $0x14] sm:$0xf]
  %v33 = vld [vmem:[%s0 + $0x18] sm:$0xf]
  %v34 = vld [vmem:[%s0 + $0x1c] sm:$0xf]
  %v35 = vld [vmem:[%s0 + $0x20] sm:$0xf]
  %v36 = vld [vmem:[%s0 + $0x24] sm:$0xf]
  %v37 = vld [vmem:[%s0 + $0x28] sm:$0xf]
  %v38 = vld [vmem:[%s0 + $0x2c] sm:$0xf]
  %v39 = vld [vmem:[%s0 + $0x30] sm:$0xf]
  %v40 = vld [vmem:[%s0 + $0x34] sm:$0xf]
  %v41 = vld [vmem:[%s0 + $0x38] sm:$0xf]
  %v42 = vld [vmem:[%s0 + $0x3c] sm:$0xf]
  %v43 = vld [vmem:[%s0 + $0x40] sm:$0xf]
  %v44 = vld [vmem:[%s0 + $0x44] sm:$0xf]
  %v45 = vld [vmem:[%s0 + $0x48] sm:$0xf]
  %v46 = vld [vmem:[%s0 + $0x4c] sm:$0xf]
  %v47 = vld [vmem:[%s0 + $0x50] sm:$0xf]
  %v48 = vld [vmem:[%s0 + $0x54] sm:$0xf]
  %v49 = vld [vmem:[%s0 + $0x58] sm:$0xf]
  %v50 = vld [vmem:[%s0 + $0x5c] sm:$0xf]
  %v51 = vld [vmem:[%s0 + $0x60] sm:$0xf]
  %v52 = vld [vmem:[%s0 + $0x64] sm:$0xf]
  %v53 = vld [vmem:[%s0 + $0x68] sm:$0xf]
  %v54 = vld [vmem:[%s0 + $0x6c] sm:$0xf]
  %v55 = vld [vmem:[%s0 + $0x70] sm:$0xf]
  %v56 = vld [vmem:[%s0 + $0x74] sm:$0xf]
  %v57 = vld [vmem:[%s0 + $0x78] sm:$0xf]
  %v58 = vld [vmem:[%s0 + $0x7c] sm:$0xf]
  %v59 = vld [vmem:[%s0 + $0x80] sm:$0xf]
  %v60 = vld [vmem:[%s0 + $0x84] sm:$0xf]
  %v61 = vld [vmem:[%s0 + $0x88] sm:$0xf]
  %v62 = vld [vmem:[%s0 + $0x8c] sm:$0xf]
  %v63 = vld [vmem:[%s0 + $0x90] sm:$0xf]
  %v64 = vld [vmem:[%s0 + $0x94] sm:$0xf]
  %v65 = vld [vmem:[%s0 + $0x98] sm:$0xf]
  %v66 = vld [vmem:[%s0 + $0x9c] sm:$0xf]
  %v67 = vld [vmem:[%s0 + $0xa0] sm:$0xf]
  %v68 = vld [vmem:[%s0 + $0xa4] sm:$0xf]
  %v69 = vld [vmem:[%s0 + $0xa8] sm:$0xf]
  %v70 = vld [vmem:[%s0 + $0xac] sm:$0xf]
  %v71 = vld [vmem:[%s0 + $0xb0] sm:$0xf]
  %v72 = vld [vmem:[%s0 + $0xb4] sm:$0xf]
  %v73 = vld [vmem:[%s0 + $0xb8] sm:$0xf]
  %v74 = vld [vmem:[%s0 + $0xbc] sm:$0xf]
  %v75 = vld [vmem:[%s0 + $0xc0] sm:$0xf]
  %v76 = vld [vmem:[%s0 + $0xc4] sm:$0xf]
  %v77 = vld [vmem:[%s0 + $0xc8] sm:$0xf]
  %v78 = vld [vmem:[%s0 + $0xcc] sm:$0xf]
  %v79 = vld [vmem:[%s0 + $0xd0] sm:$0xf]
  %v80 = vld [vmem:[%s0 + $0xd4] sm:$0xf]
  %v81 = vld [vmem:[%s0 + $0xd8] sm:$0xf]
  %v82 = vld [vmem:[%s0 + $0xdc] sm:$0xf]
  %v83 = vld [vmem:[%s0 + $0xe0] sm:$0xf]
  %v84 = vld [vmem:[%s0 + $0xe4] sm:$0xf]
  %v85 = vld [vmem:[%s0 + $0xe8] sm:$0xf]
  %v86 = vld [vmem:[%s0 + $0xec] sm:$0xf]
  %v87 = vld [vmem:[%s0 + $0xf0] sm:$0xf]
  %v88 = vld [vmem:[%s0 + $0xf4] sm:$0xf]
  %v89 = vld [vmem:[%s0 + $0xf8] sm:$0xf]
  %v90 = vld [vmem:[%s0 + $0xfc] sm:$0xf]
  %v91 = vld [vmem:[%s1] sm:$0xf]
  %v92 = vld [vmem:[%s1 + $0x4] sm:$0xf]
  %v93 = vld [vmem:[%s1 + $0x8] sm:$0xf]
  %v94 = vld [vmem:[%s1 + $0xc] sm:$0xf]
  %v95 = vld [vmem:[%s2] sm:$0x1]
  %v97 = vlaneseq
  %v98 = vshrl.u32 %v97, 7
  %v99 = vsub.s32 0, %v98
  %v100 = vrot.slane %v95, %v99
  %v166 = vunpack.c.l.b16 %v27
  %v167 = vunpack.c.l.b16 %v28
  %v168 = vunpack.c.l.b16 %v29
  %v169 = vunpack.c.l.b16 %v30
  %v170 = vunpack.c.l.b16 %v31
  %v171 = vunpack.c.l.b16 %v32
  %v172 = vunpack.c.l.b16 %v33
  %v173 = vunpack.c.l.b16 %v34
  %v174 = vunpack.c.l.b16 %v35
  %v175 = vunpack.c.l.b16 %v36
  %v176 = vunpack.c.l.b16 %v37
  %v177 = vunpack.c.l.b16 %v38
  %v178 = vunpack.c.l.b16 %v39
  %v179 = vunpack.c.l.b16 %v40
  %v180 = vunpack.c.l.b16 %v41
  %v181 = vunpack.c.l.b16 %v42
  %v182 = vunpack.c.l.b16 %v43
  %v183 = vunpack.c.l.b16 %v44
  %v184 = vunpack.c.l.b16 %v45
  %v185 = vunpack.c.l.b16 %v46
  %v186 = vunpack.c.l.b16 %v47
  %v187 = vunpack.c.l.b16 %v48
  %v188 = vunpack.c.l.b16 %v49
  %v189 = vunpack.c.l.b16 %v50
  %v190 = vunpack.c.l.b16 %v51
  %v191 = vunpack.c.l.b16 %v52
  %v192 = vunpack.c.l.b16 %v53
  %v193 = vunpack.c.l.b16 %v54
  %v194 = vunpack.c.l.b16 %v55
  %v195 = vunpack.c.l.b16 %v56
  %v196 = vunpack.c.l.b16 %v57
  %v197 = vunpack.c.l.b16 %v58
  %v198 = vunpack.c.l.b16 %v59
  %v199 = vunpack.c.l.b16 %v60
  %v200 = vunpack.c.l.b16 %v61
  %v201 = vunpack.c.l.b16 %v62
  %v202 = vunpack.c.l.b16 %v63
  %v203 = vunpack.c.l.b16 %v64
  %v204 = vunpack.c.l.b16 %v65
  %v205 = vunpack.c.l.b16 %v66
  %v206 = vunpack.c.l.b16 %v67
  %v207 = vunpack.c.l.b16 %v68
  %v208 = vunpack.c.l.b16 %v69
  %v209 = vunpack.c.l.b16 %v70
  %v210 = vunpack.c.l.b16 %v71
  %v211 = vunpack.c.l.b16 %v72
  %v212 = vunpack.c.l.b16 %v73
  %v213 = vunpack.c.l.b16 %v74
  %v214 = vunpack.c.l.b16 %v75
  %v215 = vunpack.c.l.b16 %v76
  %v216 = vunpack.c.l.b16 %v77
  %v217 = vunpack.c.l.b16 %v78
  %v218 = vunpack.c.l.b16 %v79
  %v219 = vunpack.c.l.b16 %v80
  %v220 = vunpack.c.l.b16 %v81
  %v221 = vunpack.c.l.b16 %v82
  %v222 = vunpack.c.l.b16 %v83
  %v223 = vunpack.c.l.b16 %v84
  %v224 = vunpack.c.l.b16 %v85
  %v225 = vunpack.c.l.b16 %v86
  %v226 = vunpack.c.l.b16 %v87
  %v227 = vunpack.c.l.b16 %v88
  %v228 = vunpack.c.l.b16 %v89
  %v229 = vunpack.c.l.b16 %v90
  %v230 = vpack.c.b16 %v167, %v166
  %v231 = vpack.c.b16 %v169, %v168
  %v232 = vpack.c.b16 %v171, %v170
  %v233 = vpack.c.b16 %v173, %v172
  %v234 = vpack.c.b16 %v175, %v174
  %v235 = vpack.c.b16 %v177, %v176
  %v236 = vpack.c.b16 %v179, %v178
  %v237 = vpack.c.b16 %v181, %v180
  %v238 = vpack.c.b16 %v183, %v182
  %v239 = vpack.c.b16 %v185, %v184
  %v240 = vpack.c.b16 %v187, %v186
  %v241 = vpack.c.b16 %v189, %v188
  %v242 = vpack.c.b16 %v191, %v190
  %v243 = vpack.c.b16 %v193, %v192
  %v244 = vpack.c.b16 %v195, %v194
  %v245 = vpack.c.b16 %v197, %v196
  %v246 = vpack.c.b16 %v199, %v198
  %v247 = vpack.c.b16 %v201, %v200
  %v248 = vpack.c.b16 %v203, %v202
  %v249 = vpack.c.b16 %v205, %v204
  %v250 = vpack.c.b16 %v207, %v206
  %v251 = vpack.c.b16 %v209, %v208
  %v252 = vpack.c.b16 %v211, %v210
  %v253 = vpack.c.b16 %v213, %v212
  %v254 = vpack.c.b16 %v215, %v214
  %v255 = vpack.c.b16 %v217, %v216
  %v256 = vpack.c.b16 %v219, %v218
  %v257 = vpack.c.b16 %v221, %v220
  %v258 = vpack.c.b16 %v223, %v222
  %v259 = vpack.c.b16 %v225, %v224
  %v260 = vpack.c.b16 %v227, %v226
  %v261 = vpack.c.b16 %v229, %v228
  %v266 = vunpack.c.l.b16 %v91
  %v267 = vunpack.c.l.b16 %v92
  %v268 = vunpack.c.l.b16 %v93
  %v269 = vunpack.c.l.b16 %v94
  %v270 = vpack.c.b16 %v267, %v266
  %v271 = vpack.c.b16 %v269, %v268
  %vm274 = vcmask 261120
  %v276 = vsel %vm274, %v230, 0
  %v279 = vsel %vm274, %v231, 0
  %v282 = vsel %vm274, %v232, 0
  %v285 = vsel %vm274, %v233, 0
  %v288 = vsel %vm274, %v234, 0
  %v291 = vsel %vm274, %v235, 0
  %v294 = vsel %vm274, %v236, 0
  %v297 = vsel %vm274, %v237, 0
  %v300 = vsel %vm274, %v238, 0
  %v303 = vsel %vm274, %v239, 0
  %v306 = vsel %vm274, %v240, 0
  %v309 = vsel %vm274, %v241, 0
  %v312 = vsel %vm274, %v242, 0
  %v315 = vsel %vm274, %v243, 0
  %v318 = vsel %vm274, %v244, 0
  %v321 = vsel %vm274, %v245, 0
  %v324 = vsel %vm274, %v246, 0
  %v327 = vsel %vm274, %v247, 0
  %v330 = vsel %vm274, %v248, 0
  %v333 = vsel %vm274, %v249, 0
  %v336 = vsel %vm274, %v250, 0
  %v339 = vsel %vm274, %v251, 0
  %v342 = vsel %vm274, %v252, 0
  %v345 = vsel %vm274, %v253, 0
  %v348 = vsel %vm274, %v254, 0
  %v351 = vsel %vm274, %v255, 0
  %v354 = vsel %vm274, %v256, 0
  %v357 = vsel %vm274, %v257, 0
  %v360 = vsel %vm274, %v258, 0
  %v363 = vsel %vm274, %v259, 0
  %v366 = vsel %vm274, %v260, 0
  %v369 = vsel %vm274, %v261, 0
  %371 = vmatprep.subr.bf16.mxu0 0
  %372 = vmatpush1.bf16.msra.mxu0 %v270
  %373 = vmatprep.subr.bf16.mxu0 0
  %374 = vmatpush1.bf16.msra.mxu0 %v271
  %375 = vmatprep.subr.bf16.mxu0 0
  %376 = vmatpush1.bf16.msra.mxu0 0
  %377 = vmatprep.subr.bf16.mxu0 0
  %378 = vmatpush1.bf16.msra.mxu0 0
  %379 = vmatprep.subr.bf16.mxu0 0
  %380 = vmatpush1.bf16.msra.mxu0 0
  %381 = vmatprep.subr.bf16.mxu0 0
  %382 = vmatpush1.bf16.msra.mxu0 0
  %383 = vmatprep.subr.bf16.mxu0 0
  %384 = vmatpush1.bf16.msra.mxu0 0
  %385 = vmatprep.subr.bf16.mxu0 0
  %386 = vmatpush1.bf16.msra.mxu0 0
  %387 = vmatprep.subr.bf16.mxu0 0
  %388 = vmatpush1.bf16.msra.mxu0 0
  %389 = vmatprep.subr.bf16.mxu0 0
  %390 = vmatpush1.bf16.msra.mxu0 0
  %391 = vmatprep.subr.bf16.mxu0 0
  %392 = vmatpush1.bf16.msra.mxu0 0
  %393 = vmatprep.subr.bf16.mxu0 0
  %394 = vmatpush1.bf16.msra.mxu0 0
  %395 = vmatprep.subr.bf16.mxu0 0
  %396 = vmatpush1.bf16.msra.mxu0 0
  %397 = vmatprep.subr.bf16.mxu0 0
  %398 = vmatpush1.bf16.msra.mxu0 0
  %399 = vmatprep.subr.bf16.mxu0 0
  %400 = vmatpush1.bf16.msra.mxu0 0
  %401 = vmatprep.subr.bf16.mxu0 0
  %402 = vmatpush1.bf16.msra.mxu0 0
  %403 = vmatprep.mubr.bf16.mxu0 0
  %404 = vmatmul.mubr.bf16.gmra.mrb[0].mxu0 %v276
  %v405 = vpop.f32.mrb[0].mxu0
  %v406 = vadd.f32 %v100, %v405
  %v407 = vpop.f32.mrb[0].mxu0
  %v408 = vpop.f32.mrb[0].mxu0
  %v409 = vadd.f32 %v100, %v408
  %v410 = vpop.f32.mrb[0].mxu0
  %411 = vmatprep.mubr.bf16.mxu0 0
  %412 = vmatmul.mubr.bf16.gmra.mrb[0].mxu0 %v279
  %v413 = vpop.f32.mrb[0].mxu0
  %v414 = vadd.f32 %v100, %v413
  %v415 = vpop.f32.mrb[0].mxu0
  %v416 = vpop.f32.mrb[0].mxu0
  %v417 = vadd.f32 %v100, %v416
  %v418 = vpop.f32.mrb[0].mxu0
  %419 = vmatprep.mubr.bf16.mxu0 0
  %420 = vmatmul.mubr.bf16.gmra.mrb[0].mxu0 %v282
  %v421 = vpop.f32.mrb[0].mxu0
  %v422 = vadd.f32 %v100, %v421
  %v423 = vpop.f32.mrb[0].mxu0
  %v424 = vpop.f32.mrb[0].mxu0
  %v425 = vadd.f32 %v100, %v424
  %v426 = vpop.f32.mrb[0].mxu0
  %427 = vmatprep.mubr.bf16.mxu0 0
  %428 = vmatmul.mubr.bf16.gmra.mrb[0].mxu0 %v285
  %v429 = vpop.f32.mrb[0].mxu0
  %v430 = vadd.f32 %v100, %v429
  %v431 = vpop.f32.mrb[0].mxu0
  %v432 = vpop.f32.mrb[0].mxu0
  %v433 = vadd.f32 %v100, %v432
  %v434 = vpop.f32.mrb[0].mxu0
  %435 = vmatprep.mubr.bf16.mxu0 0
  %436 = vmatmul.mubr.bf16.gmra.mrb[0].mxu0 %v288
  %v437 = vpop.f32.mrb[0].mxu0
  %v438 = vadd.f32 %v100, %v437
  %v439 = vpop.f32.mrb[0].mxu0
  %v440 = vpop.f32.mrb[0].mxu0
  %v441 = vadd.f32 %v100, %v440
  %v442 = vpop.f32.mrb[0].mxu0
  %443 = vmatprep.mubr.bf16.mxu0 0
  %444 = vmatmul.mubr.bf16.gmra.mrb[0].mxu0 %v291
  %v445 = vpop.f32.mrb[0].mxu0
  %v446 = vadd.f32 %v100, %v445
  %v447 = vpop.f32.mrb[0].mxu0
  %v448 = vpop.f32.mrb[0].mxu0
  %v449 = vadd.f32 %v100, %v448
  %v450 = vpop.f32.mrb[0].mxu0
  %451 = vmatprep.mubr.bf16.mxu0 0
  %452 = vmatmul.mubr.bf16.gmra.mrb[0].mxu0 %v294
  %v453 = vpop.f32.mrb[0].mxu0
  %v454 = vadd.f32 %v100, %v453
  %v455 = vpop.f32.mrb[0].mxu0
  %v456 = vpop.f32.mrb[0].mxu0
  %v457 = vadd.f32 %v100, %v456
  %v458 = vpop.f32.mrb[0].mxu0
  %459 = vmatprep.mubr.bf16.mxu0 0
  %460 = vmatmul.mubr.bf16.gmra.mrb[0].mxu0 %v297
  %v461 = vpop.f32.mrb[0].mxu0
  %v462 = vadd.f32 %v100, %v461
  %v463 = vpop.f32.mrb[0].mxu0
  %v464 = vpop.f32.mrb[0].mxu0
  %v465 = vadd.f32 %v100, %v464
  %v466 = vpop.f32.mrb[0].mxu0
  %467 = vmatprep.mubr.bf16.mxu0 0
  %468 = vmatmul.mubr.bf16.gmra.mrb[0].mxu0 %v300
  %v469 = vpop.f32.mrb[0].mxu0
  %v470 = vadd.f32 %v100, %v469
  %v471 = vpop.f32.mrb[0].mxu0
  %v472 = vpop.f32.mrb[0].mxu0
  %v473 = vadd.f32 %v100, %v472
  %v474 = vpop.f32.mrb[0].mxu0
  %475 = vmatprep.mubr.bf16.mxu0 0
  %476 = vmatmul.mubr.bf16.gmra.mrb[0].mxu0 %v303
  %v477 = vpop.f32.mrb[0].mxu0
  %v478 = vadd.f32 %v100, %v477
  %v479 = vpop.f32.mrb[0].mxu0
  %v480 = vpop.f32.mrb[0].mxu0
  %v481 = vadd.f32 %v100, %v480
  %v482 = vpop.f32.mrb[0].mxu0
  %483 = vmatprep.mubr.bf16.mxu0 0
  %484 = vmatmul.mubr.bf16.gmra.mrb[0].mxu0 %v306
  %v485 = vpop.f32.mrb[0].mxu0
  %v486 = vadd.f32 %v100, %v485
  %v487 = vpop.f32.mrb[0].mxu0
  %v488 = vpop.f32.mrb[0].mxu0
  %v489 = vadd.f32 %v100, %v488
  %v490 = vpop.f32.mrb[0].mxu0
  %491 = vmatprep.mubr.bf16.mxu0 0
  %492 = vmatmul.mubr.bf16.gmra.mrb[0].mxu0 %v309
  %v493 = vpop.f32.mrb[0].mxu0
  %v494 = vadd.f32 %v100, %v493
  %v495 = vpop.f32.mrb[0].mxu0
  %v496 = vpop.f32.mrb[0].mxu0
  %v497 = vadd.f32 %v100, %v496
  %v498 = vpop.f32.mrb[0].mxu0
  %499 = vmatprep.mubr.bf16.mxu0 0
  %500 = vmatmul.mubr.bf16.gmra.mrb[0].mxu0 %v312
  %v501 = vpop.f32.mrb[0].mxu0
  %v502 = vadd.f32 %v100, %v501
  %v503 = vpop.f32.mrb[0].mxu0
  %v504 = vpop.f32.mrb[0].mxu0
  %v505 = vadd.f32 %v100, %v504
  %v506 = vpop.f32.mrb[0].mxu0
  %507 = vmatprep.mubr.bf16.mxu0 0
  %508 = vmatmul.mubr.bf16.gmra.mrb[0].mxu0 %v315
  %v509 = vpop.f32.mrb[0].mxu0
  %v510 = vadd.f32 %v100, %v509
  %v511 = vpop.f32.mrb[0].mxu0
  %v512 = vpop.f32.mrb[0].mxu0
  %v513 = vadd.f32 %v100, %v512
  %v514 = vpop.f32.mrb[0].mxu0
  %515 = vmatprep.mubr.bf16.mxu0 0
  %516 = vmatmul.mubr.bf16.gmra.mrb[0].mxu0 %v318
  %v517 = vpop.f32.mrb[0].mxu0
  %v518 = vadd.f32 %v100, %v517
  %v519 = vpop.f32.mrb[0].mxu0
  %v520 = vpop.f32.mrb[0].mxu0
  %v521 = vadd.f32 %v100, %v520
  %v522 = vpop.f32.mrb[0].mxu0
  %523 = vmatprep.mubr.bf16.mxu0 0
  %524 = vmatmul.mubr.bf16.gmra.mrb[0].mxu0 %v321
  %v525 = vpop.f32.mrb[0].mxu0
  %v526 = vadd.f32 %v100, %v525
  %v527 = vpop.f32.mrb[0].mxu0
  %v528 = vpop.f32.mrb[0].mxu0
  %v529 = vadd.f32 %v100, %v528
  %v530 = vpop.f32.mrb[0].mxu0
  %531 = vmatprep.mubr.bf16.mxu0 0
  %532 = vmatmul.mubr.bf16.gmra.mrb[0].mxu0 %v324
  %v533 = vpop.f32.mrb[0].mxu0
  %v534 = vadd.f32 %v100, %v533
  %v535 = vpop.f32.mrb[0].mxu0
  %v536 = vpop.f32.mrb[0].mxu0
  %v537 = vadd.f32 %v100, %v536
  %v538 = vpop.f32.mrb[0].mxu0
  %539 = vmatprep.mubr.bf16.mxu0 0
  %540 = vmatmul.mubr.bf16.gmra.mrb[0].mxu0 %v327
  %v541 = vpop.f32.mrb[0].mxu0
  %v542 = vadd.f32 %v100, %v541
  %v543 = vpop.f32.mrb[0].mxu0
  %v544 = vpop.f32.mrb[0].mxu0
  %v545 = vadd.f32 %v100, %v544
  %v546 = vpop.f32.mrb[0].mxu0
  %547 = vmatprep.mubr.bf16.mxu0 0
  %548 = vmatmul.mubr.bf16.gmra.mrb[0].mxu0 %v330
  %v549 = vpop.f32.mrb[0].mxu0
  %v550 = vadd.f32 %v100, %v549
  %v551 = vpop.f32.mrb[0].mxu0
  %v552 = vpop.f32.mrb[0].mxu0
  %v553 = vadd.f32 %v100, %v552
  %v554 = vpop.f32.mrb[0].mxu0
  %555 = vmatprep.mubr.bf16.mxu0 0
  %556 = vmatmul.mubr.bf16.gmra.mrb[0].mxu0 %v333
  %v557 = vpop.f32.mrb[0].mxu0
  %v558 = vadd.f32 %v100, %v557
  %v559 = vpop.f32.mrb[0].mxu0
  %v560 = vpop.f32.mrb[0].mxu0
  %v561 = vadd.f32 %v100, %v560
  %v562 = vpop.f32.mrb[0].mxu0
  %563 = vmatprep.mubr.bf16.mxu0 0
  %564 = vmatmul.mubr.bf16.gmra.mrb[0].mxu0 %v336
  %v565 = vpop.f32.mrb[0].mxu0
  %v566 = vadd.f32 %v100, %v565
  %v567 = vpop.f32.mrb[0].mxu0
  %v568 = vpop.f32.mrb[0].mxu0
  %v569 = vadd.f32 %v100, %v568
  %v570 = vpop.f32.mrb[0].mxu0
  %571 = vmatprep.mubr.bf16.mxu0 0
  %572 = vmatmul.mubr.bf16.gmra.mrb[0].mxu0 %v339
  %v573 = vpop.f32.mrb[0].mxu0
  %v574 = vadd.f32 %v100, %v573
  %v575 = vpop.f32.mrb[0].mxu0
  %v576 = vpop.f32.mrb[0].mxu0
  %v577 = vadd.f32 %v100, %v576
  %v578 = vpop.f32.mrb[0].mxu0
  %579 = vmatprep.mubr.bf16.mxu0 0
  %580 = vmatmul.mubr.bf16.gmra.mrb[0].mxu0 %v342
  %v581 = vpop.f32.mrb[0].mxu0
  %v582 = vadd.f32 %v100, %v581
  %v583 = vpop.f32.mrb[0].mxu0
  %v584 = vpop.f32.mrb[0].mxu0
  %v585 = vadd.f32 %v100, %v584
  %v586 = vpop.f32.mrb[0].mxu0
  %587 = vmatprep.mubr.bf16.mxu0 0
  %588 = vmatmul.mubr.bf16.gmra.mrb[0].mxu0 %v345
  %v589 = vpop.f32.mrb[0].mxu0
  %v590 = vadd.f32 %v100, %v589
  %v591 = vpop.f32.mrb[0].mxu0
  %v592 = vpop.f32.mrb[0].mxu0
  %v593 = vadd.f32 %v100, %v592
  %v594 = vpop.f32.mrb[0].mxu0
  %595 = vmatprep.mubr.bf16.mxu0 0
  %596 = vmatmul.mubr.bf16.gmra.mrb[0].mxu0 %v348
  %v597 = vpop.f32.mrb[0].mxu0
  %v598 = vadd.f32 %v100, %v597
  %v599 = vpop.f32.mrb[0].mxu0
  %v600 = vpop.f32.mrb[0].mxu0
  %v601 = vadd.f32 %v100, %v600
  %v602 = vpop.f32.mrb[0].mxu0
  %603 = vmatprep.mubr.bf16.mxu0 0
  %604 = vmatmul.mubr.bf16.gmra.mrb[0].mxu0 %v351
  %v605 = vpop.f32.mrb[0].mxu0
  %v606 = vadd.f32 %v100, %v605
  %v607 = vpop.f32.mrb[0].mxu0
  %v608 = vpop.f32.mrb[0].mxu0
  %v609 = vadd.f32 %v100, %v608
  %v610 = vpop.f32.mrb[0].mxu0
  %611 = vmatprep.mubr.bf16.mxu0 0
  %612 = vmatmul.mubr.bf16.gmra.mrb[0].mxu0 %v354
  %v613 = vpop.f32.mrb[0].mxu0
  %v614 = vadd.f32 %v100, %v613
  %v615 = vpop.f32.mrb[0].mxu0
  %v616 = vpop.f32.mrb[0].mxu0
  %v617 = vadd.f32 %v100, %v616
  %v618 = vpop.f32.mrb[0].mxu0
  %619 = vmatprep.mubr.bf16.mxu0 0
  %620 = vmatmul.mubr.bf16.gmra.mrb[0].mxu0 %v357
  %v621 = vpop.f32.mrb[0].mxu0
  %v622 = vadd.f32 %v100, %v621
  %v623 = vpop.f32.mrb[0].mxu0
  %v624 = vpop.f32.mrb[0].mxu0
  %v625 = vadd.f32 %v100, %v624
  %v626 = vpop.f32.mrb[0].mxu0
  %627 = vmatprep.mubr.bf16.mxu0 0
  %628 = vmatmul.mubr.bf16.gmra.mrb[0].mxu0 %v360
  %v629 = vpop.f32.mrb[0].mxu0
  %v630 = vadd.f32 %v100, %v629
  %v631 = vpop.f32.mrb[0].mxu0
  %v632 = vpop.f32.mrb[0].mxu0
  %v633 = vadd.f32 %v100, %v632
  %v634 = vpop.f32.mrb[0].mxu0
  %635 = vmatprep.mubr.bf16.mxu0 0
  %636 = vmatmul.mubr.bf16.gmra.mrb[0].mxu0 %v363
  %v637 = vpop.f32.mrb[0].mxu0
  %v638 = vadd.f32 %v100, %v637
  %v639 = vpop.f32.mrb[0].mxu0
  %v640 = vpop.f32.mrb[0].mxu0
  %v641 = vadd.f32 %v100, %v640
  %v642 = vpop.f32.mrb[0].mxu0
  %643 = vmatprep.mubr.bf16.mxu0 0
  %644 = vmatmul.mubr.bf16.gmra.mrb[0].mxu0 %v366
  %v645 = vpop.f32.mrb[0].mxu0
  %v646 = vadd.f32 %v100, %v645
  %v647 = vpop.f32.mrb[0].mxu0
  %v648 = vpop.f32.mrb[0].mxu0
  %v649 = vadd.f32 %v100, %v648
  %v650 = vpop.f32.mrb[0].mxu0
  %651 = vmatprep.mubr.bf16.mxu0 0
  %652 = vmatmul.mubr.bf16.gmra.mrb[0].mxu0 %v369
  %v653 = vpop.f32.mrb[0].mxu0
  %v654 = vadd.f32 %v100, %v653
  %v655 = vpop.f32.mrb[0].mxu0
  %v656 = vpop.f32.mrb[0].mxu0
  %v657 = vadd.f32 %v100, %v656
  %v658 = vpop.f32.mrb[0].mxu0
  %659 = vdwg.mxu0
  %v660 = vtanh.pop %v406
  %v661 = vtanh.pop %v409
  %v662 = vtanh.pop %v414
  %v663 = vtanh.pop %v417
  %v664 = vtanh.pop %v422
  %v665 = vtanh.pop %v425
  %v666 = vtanh.pop %v430
  %v667 = vtanh.pop %v433
  %v668 = vtanh.pop %v438
  %v669 = vtanh.pop %v441
  %v670 = vtanh.pop %v446
  %v671 = vtanh.pop %v449
  %v672 = vtanh.pop %v454
  %v673 = vtanh.pop %v457
  %v674 = vtanh.pop %v462
  %v675 = vtanh.pop %v465
  %v676 = vtanh.pop %v470
  %v677 = vtanh.pop %v473
  %v678 = vtanh.pop %v478
  %v679 = vtanh.pop %v481
  %v680 = vtanh.pop %v486
  %v681 = vtanh.pop %v489
  %v682 = vtanh.pop %v494
  %v683 = vtanh.pop %v497
  %v684 = vtanh.pop %v502
  %v685 = vtanh.pop %v505
  %v686 = vtanh.pop %v510
  %v687 = vtanh.pop %v513
  %v688 = vtanh.pop %v518
  %v689 = vtanh.pop %v521
  %v690 = vtanh.pop %v526
  %v691 = vtanh.pop %v529
  %v692 = vtanh.pop %v534
  %v693 = vtanh.pop %v537
  %v694 = vtanh.pop %v542
  %v695 = vtanh.pop %v545
  %v696 = vtanh.pop %v550
  %v697 = vtanh.pop %v553
  %v698 = vtanh.pop %v558
  %v699 = vtanh.pop %v561
  %v700 = vtanh.pop %v566
  %v701 = vtanh.pop %v569
  %v702 = vtanh.pop %v574
  %v703 = vtanh.pop %v577
  %v704 = vtanh.pop %v582
  %v705 = vtanh.pop %v585
  %v706 = vtanh.pop %v590
  %v707 = vtanh.pop %v593
  %v708 = vtanh.pop %v598
  %v709 = vtanh.pop %v601
  %v710 = vtanh.pop %v606
  %v711 = vtanh.pop %v609
  %v712 = vtanh.pop %v614
  %v713 = vtanh.pop %v617
  %v714 = vtanh.pop %v622
  %v715 = vtanh.pop %v625
  %v716 = vtanh.pop %v630
  %v717 = vtanh.pop %v633
  %v718 = vtanh.pop %v638
  %v719 = vtanh.pop %v641
  %v720 = vtanh.pop %v646
  %v721 = vtanh.pop %v649
  %v722 = vtanh.pop %v654
  %v723 = vtanh.pop %v657
  %v724 = vpack.c.bf16 %v661, %v660
  %v725 = vpack.c.bf16 %v663, %v662
  %v726 = vpack.c.bf16 %v665, %v664
  %v727 = vpack.c.bf16 %v667, %v666
  %v728 = vpack.c.bf16 %v669, %v668
  %v729 = vpack.c.bf16 %v671, %v670
  %v730 = vpack.c.bf16 %v673, %v672
  %v731 = vpack.c.bf16 %v675, %v674
  %v732 = vpack.c.bf16 %v677, %v676
  %v733 = vpack.c.bf16 %v679, %v678
  %v734 = vpack.c.bf16 %v681, %v680
  %v735 = vpack.c.bf16 %v683, %v682
  %v736 = vpack.c.bf16 %v685, %v684
  %v737 = vpack.c.bf16 %v687, %v686
  %v738 = vpack.c.bf16 %v689, %v688
  %v739 = vpack.c.bf16 %v691, %v690
  %v740 = vpack.c.bf16 %v693, %v692
  %v741 = vpack.c.bf16 %v695, %v694
  %v742 = vpack.c.bf16 %v697, %v696
  %v743 = vpack.c.bf16 %v699, %v698
  %v744 = vpack.c.bf16 %v701, %v700
  %v745 = vpack.c.bf16 %v703, %v702
  %v746 = vpack.c.bf16 %v705, %v704
  %v747 = vpack.c.bf16 %v707, %v706
  %v748 = vpack.c.bf16 %v709, %v708
  %v749 = vpack.c.bf16 %v711, %v710
  %v750 = vpack.c.bf16 %v713, %v712
  %v751 = vpack.c.bf16 %v715, %v714
  %v752 = vpack.c.bf16 %v717, %v716
  %v753 = vpack.c.bf16 %v719, %v718
  %v754 = vpack.c.bf16 %v721, %v720
  %v755 = vpack.c.bf16 %v723, %v722
  %v756 = vld [vmem:[%s3] sm:$0xf]
  %v757 = vld [vmem:[%s3 + $0x4] sm:$0xf]
  %v758 = vld [vmem:[%s3 + $0x8] sm:$0xf]
  %v759 = vld [vmem:[%s3 + $0xc] sm:$0xf]
  %v760 = vld [vmem:[%s3 + $0x10] sm:$0xf]
  %v761 = vld [vmem:[%s3 + $0x14] sm:$0xf]
  %v762 = vld [vmem:[%s3 + $0x18] sm:$0xf]
  %v763 = vld [vmem:[%s3 + $0x1c] sm:$0xf]
  %v764 = vld [vmem:[%s4] sm:$0x1]
  %v766 = vlaneseq
  %v767 = vshrl.u32 %v766, 7
  %v768 = vsub.s32 0, %v767
  %v769 = vrot.slane %v764, %v768
  %v779 = vunpack.c.l.b16 %v756
  %v780 = vunpack.c.l.b16 %v757
  %v781 = vunpack.c.l.b16 %v758
  %v782 = vunpack.c.l.b16 %v759
  %v783 = vunpack.c.l.b16 %v760
  %v784 = vunpack.c.l.b16 %v761
  %v785 = vunpack.c.l.b16 %v762
  %v786 = vunpack.c.l.b16 %v763
  %v787 = vpack.c.b16 %v780, %v779
  %v788 = vpack.c.b16 %v782, %v781
  %v789 = vpack.c.b16 %v784, %v783
  %v790 = vpack.c.b16 %v786, %v785
  %vm795 = vcmask 523264
  %v797 = vsel %vm795, %v724, 0
  %v800 = vsel %vm795, %v725, 0
  %v803 = vsel %vm795, %v726, 0
  %v806 = vsel %vm795, %v727, 0
  %v809 = vsel %vm795, %v728, 0
  %v812 = vsel %vm795, %v729, 0
  %v815 = vsel %vm795, %v730, 0
  %v818 = vsel %vm795, %v731, 0
  %v821 = vsel %vm795, %v732, 0
  %v824 = vsel %vm795, %v733, 0
  %v827 = vsel %vm795, %v734, 0
  %v830 = vsel %vm795, %v735, 0
  %v833 = vsel %vm795, %v736, 0
  %v836 = vsel %vm795, %v737, 0
  %v839 = vsel %vm795, %v738, 0
  %v842 = vsel %vm795, %v739, 0
  %v845 = vsel %vm795, %v740, 0
  %v848 = vsel %vm795, %v741, 0
  %v851 = vsel %vm795, %v742, 0
  %v854 = vsel %vm795, %v743, 0
  %v857 = vsel %vm795, %v744, 0
  %v860 = vsel %vm795, %v745, 0
  %v863 = vsel %vm795, %v746, 0
  %v866 = vsel %vm795, %v747, 0
  %v869 = vsel %vm795, %v748, 0
  %v872 = vsel %vm795, %v749, 0
  %v875 = vsel %vm795, %v750, 0
  %v878 = vsel %vm795, %v751, 0
  %v881 = vsel %vm795, %v752, 0
  %v884 = vsel %vm795, %v753, 0
  %v887 = vsel %vm795, %v754, 0
  %v890 = vsel %vm795, %v755, 0
  %892 = vmatprep.subr.bf16.mxu0 0
  %893 = vmatpush1.bf16.msra.mxu0 %v787
  %894 = vmatprep.subr.bf16.mxu0 0
  %895 = vmatpush1.bf16.msra.mxu0 %v788
  %896 = vmatprep.subr.bf16.mxu0 0
  %897 = vmatpush1.bf16.msra.mxu0 %v789
  %898 = vmatprep.subr.bf16.mxu0 0
  %899 = vmatpush1.bf16.msra.mxu0 %v790
  %900 = vmatprep.subr.bf16.mxu0 0
  %901 = vmatpush1.bf16.msra.mxu0 0
  %902 = vmatprep.subr.bf16.mxu0 0
  %903 = vmatpush1.bf16.msra.mxu0 0
  %904 = vmatprep.subr.bf16.mxu0 0
  %905 = vmatpush1.bf16.msra.mxu0 0
  %906 = vmatprep.subr.bf16.mxu0 0
  %907 = vmatpush1.bf16.msra.mxu0 0
  %908 = vmatprep.subr.bf16.mxu0 0
  %909 = vmatpush1.bf16.msra.mxu0 0
  %910 = vmatprep.subr.bf16.mxu0 0
  %911 = vmatpush1.bf16.msra.mxu0 0
  %912 = vmatprep.subr.bf16.mxu0 0
  %913 = vmatpush1.bf16.msra.mxu0 0
  %914 = vmatprep.subr.bf16.mxu0 0
  %915 = vmatpush1.bf16.msra.mxu0 0
  %916 = vmatprep.subr.bf16.mxu0 0
  %917 = vmatpush1.bf16.msra.mxu0 0
  %918 = vmatprep.subr.bf16.mxu0 0
  %919 = vmatpush1.bf16.msra.mxu0 0
  %920 = vmatprep.subr.bf16.mxu0 0
  %921 = vmatpush1.bf16.msra.mxu0 0
  %922 = vmatprep.subr.bf16.mxu0 0
  %923 = vmatpush1.bf16.msra.mxu0 0
  %924 = vmatprep.mubr.bf16.mxu0 0
  %925 = vmatmul.mubr.bf16.gmra.mrb[0].mxu0 %v797
  %v926 = vpop.f32.mrb[0].mxu0
  %v927 = vadd.f32 %v769, %v926
  %v928 = vpop.f32.mrb[0].mxu0
  %v929 = vpop.f32.mrb[0].mxu0
  %v930 = vadd.f32 %v769, %v929
  %v931 = vpop.f32.mrb[0].mxu0
  %932 = vmatprep.mubr.bf16.mxu0 0
  %933 = vmatmul.mubr.bf16.gmra.mrb[0].mxu0 %v800
  %v934 = vpop.f32.mrb[0].mxu0
  %v935 = vadd.f32 %v769, %v934
  %v936 = vpop.f32.mrb[0].mxu0
  %v937 = vpop.f32.mrb[0].mxu0
  %v938 = vadd.f32 %v769, %v937
  %v939 = vpop.f32.mrb[0].mxu0
  %940 = vmatprep.mubr.bf16.mxu0 0
  %941 = vmatmul.mubr.bf16.gmra.mrb[0].mxu0 %v803
  %v942 = vpop.f32.mrb[0].mxu0
  %v943 = vadd.f32 %v769, %v942
  %v944 = vpop.f32.mrb[0].mxu0
  %v945 = vpop.f32.mrb[0].mxu0
  %v946 = vadd.f32 %v769, %v945
  %v947 = vpop.f32.mrb[0].mxu0
  %948 = vmatprep.mubr.bf16.mxu0 0
  %949 = vmatmul.mubr.bf16.gmra.mrb[0].mxu0 %v806
  %v950 = vpop.f32.mrb[0].mxu0
  %v951 = vadd.f32 %v769, %v950
  %v952 = vpop.f32.mrb[0].mxu0
  %v953 = vpop.f32.mrb[0].mxu0
  %v954 = vadd.f32 %v769, %v953
  %v955 = vpop.f32.mrb[0].mxu0
  %956 = vmatprep.mubr.bf16.mxu0 0
  %957 = vmatmul.mubr.bf16.gmra.mrb[0].mxu0 %v809
  %v958 = vpop.f32.mrb[0].mxu0
  %v959 = vadd.f32 %v769, %v958
  %v960 = vpop.f32.mrb[0].mxu0
  %v961 = vpop.f32.mrb[0].mxu0
  %v962 = vadd.f32 %v769, %v961
  %v963 = vpop.f32.mrb[0].mxu0
  %964 = vmatprep.mubr.bf16.mxu0 0
  %965 = vmatmul.mubr.bf16.gmra.mrb[0].mxu0 %v812
  %v966 = vpop.f32.mrb[0].mxu0
  %v967 = vadd.f32 %v769, %v966
  %v968 = vpop.f32.mrb[0].mxu0
  %v969 = vpop.f32.mrb[0].mxu0
  %v970 = vadd.f32 %v769, %v969
  %v971 = vpop.f32.mrb[0].mxu0
  %972 = vmatprep.mubr.bf16.mxu0 0
  %973 = vmatmul.mubr.bf16.gmra.mrb[0].mxu0 %v815
  %v974 = vpop.f32.mrb[0].mxu0
  %v975 = vadd.f32 %v769, %v974
  %v976 = vpop.f32.mrb[0].mxu0
  %v977 = vpop.f32.mrb[0].mxu0
  %v978 = vadd.f32 %v769, %v977
  %v979 = vpop.f32.mrb[0].mxu0
  %980 = vmatprep.mubr.bf16.mxu0 0
  %981 = vmatmul.mubr.bf16.gmra.mrb[0].mxu0 %v818
  %v982 = vpop.f32.mrb[0].mxu0
  %v983 = vadd.f32 %v769, %v982
  %v984 = vpop.f32.mrb[0].mxu0
  %v985 = vpop.f32.mrb[0].mxu0
  %v986 = vadd.f32 %v769, %v985
  %v987 = vpop.f32.mrb[0].mxu0
  %988 = vmatprep.mubr.bf16.mxu0 0
  %989 = vmatmul.mubr.bf16.gmra.mrb[0].mxu0 %v821
  %v990 = vpop.f32.mrb[0].mxu0
  %v991 = vadd.f32 %v769, %v990
  %v992 = vpop.f32.mrb[0].mxu0
  %v993 = vpop.f32.mrb[0].mxu0
  %v994 = vadd.f32 %v769, %v993
  %v995 = vpop.f32.mrb[0].mxu0
  %996 = vmatprep.mubr.bf16.mxu0 0
  %997 = vmatmul.mubr.bf16.gmra.mrb[0].mxu0 %v824
  %v998 = vpop.f32.mrb[0].mxu0
  %v999 = vadd.f32 %v769, %v998
  %v1000 = vpop.f32.mrb[0].mxu0
  %v1001 = vpop.f32.mrb[0].mxu0
  %v1002 = vadd.f32 %v769, %v1001
  %v1003 = vpop.f32.mrb[0].mxu0
  %1004 = vmatprep.mubr.bf16.mxu0 0
  %1005 = vmatmul.mubr.bf16.gmra.mrb[0].mxu0 %v827
  %v1006 = vpop.f32.mrb[0].mxu0
  %v1007 = vadd.f32 %v769, %v1006
  %v1008 = vpop.f32.mrb[0].mxu0
  %v1009 = vpop.f32.mrb[0].mxu0
  %v1010 = vadd.f32 %v769, %v1009
  %v1011 = vpop.f32.mrb[0].mxu0
  %1012 = vmatprep.mubr.bf16.mxu0 0
  %1013 = vmatmul.mubr.bf16.gmra.mrb[0].mxu0 %v830
  %v1014 = vpop.f32.mrb[0].mxu0
  %v1015 = vadd.f32 %v769, %v1014
  %v1016 = vpop.f32.mrb[0].mxu0
  %v1017 = vpop.f32.mrb[0].mxu0
  %v1018 = vadd.f32 %v769, %v1017
  %v1019 = vpop.f32.mrb[0].mxu0
  %1020 = vmatprep.mubr.bf16.mxu0 0
  %1021 = vmatmul.mubr.bf16.gmra.mrb[0].mxu0 %v833
  %v1022 = vpop.f32.mrb[0].mxu0
  %v1023 = vadd.f32 %v769, %v1022
  %v1024 = vpop.f32.mrb[0].mxu0
  %v1025 = vpop.f32.mrb[0].mxu0
  %v1026 = vadd.f32 %v769, %v1025
  %v1027 = vpop.f32.mrb[0].mxu0
  %1028 = vmatprep.mubr.bf16.mxu0 0
  %1029 = vmatmul.mubr.bf16.gmra.mrb[0].mxu0 %v836
  %v1030 = vpop.f32.mrb[0].mxu0
  %v1031 = vadd.f32 %v769, %v1030
  %v1032 = vpop.f32.mrb[0].mxu0
  %v1033 = vpop.f32.mrb[0].mxu0
  %v1034 = vadd.f32 %v769, %v1033
  %v1035 = vpop.f32.mrb[0].mxu0
  %1036 = vmatprep.mubr.bf16.mxu0 0
  %1037 = vmatmul.mubr.bf16.gmra.mrb[0].mxu0 %v839
  %v1038 = vpop.f32.mrb[0].mxu0
  %v1039 = vadd.f32 %v769, %v1038
  %v1040 = vpop.f32.mrb[0].mxu0
  %v1041 = vpop.f32.mrb[0].mxu0
  %v1042 = vadd.f32 %v769, %v1041
  %v1043 = vpop.f32.mrb[0].mxu0
  %1044 = vmatprep.mubr.bf16.mxu0 0
  %1045 = vmatmul.mubr.bf16.gmra.mrb[0].mxu0 %v842
  %v1046 = vpop.f32.mrb[0].mxu0
  %v1047 = vadd.f32 %v769, %v1046
  %v1048 = vpop.f32.mrb[0].mxu0
  %v1049 = vpop.f32.mrb[0].mxu0
  %v1050 = vadd.f32 %v769, %v1049
  %v1051 = vpop.f32.mrb[0].mxu0
  %1052 = vmatprep.mubr.bf16.mxu0 0
  %1053 = vmatmul.mubr.bf16.gmra.mrb[0].mxu0 %v845
  %v1054 = vpop.f32.mrb[0].mxu0
  %v1055 = vadd.f32 %v769, %v1054
  %v1056 = vpop.f32.mrb[0].mxu0
  %v1057 = vpop.f32.mrb[0].mxu0
  %v1058 = vadd.f32 %v769, %v1057
  %v1059 = vpop.f32.mrb[0].mxu0
  %1060 = vmatprep.mubr.bf16.mxu0 0
  %1061 = vmatmul.mubr.bf16.gmra.mrb[0].mxu0 %v848
  %v1062 = vpop.f32.mrb[0].mxu0
  %v1063 = vadd.f32 %v769, %v1062
  %v1064 = vpop.f32.mrb[0].mxu0
  %v1065 = vpop.f32.mrb[0].mxu0
  %v1066 = vadd.f32 %v769, %v1065
  %v1067 = vpop.f32.mrb[0].mxu0
  %1068 = vmatprep.mubr.bf16.mxu0 0
  %1069 = vmatmul.mubr.bf16.gmra.mrb[0].mxu0 %v851
  %v1070 = vpop.f32.mrb[0].mxu0
  %v1071 = vadd.f32 %v769, %v1070
  %v1072 = vpop.f32.mrb[0].mxu0
  %v1073 = vpop.f32.mrb[0].mxu0
  %v1074 = vadd.f32 %v769, %v1073
  %v1075 = vpop.f32.mrb[0].mxu0
  %1076 = vmatprep.mubr.bf16.mxu0 0
  %1077 = vmatmul.mubr.bf16.gmra.mrb[0].mxu0 %v854
  %v1078 = vpop.f32.mrb[0].mxu0
  %v1079 = vadd.f32 %v769, %v1078
  %v1080 = vpop.f32.mrb[0].mxu0
  %v1081 = vpop.f32.mrb[0].mxu0
  %v1082 = vadd.f32 %v769, %v1081
  %v1083 = vpop.f32.mrb[0].mxu0
  %1084 = vmatprep.mubr.bf16.mxu0 0
  %1085 = vmatmul.mubr.bf16.gmra.mrb[0].mxu0 %v857
  %v1086 = vpop.f32.mrb[0].mxu0
  %v1087 = vadd.f32 %v769, %v1086
  %v1088 = vpop.f32.mrb[0].mxu0
  %v1089 = vpop.f32.mrb[0].mxu0
  %v1090 = vadd.f32 %v769, %v1089
  %v1091 = vpop.f32.mrb[0].mxu0
  %1092 = vmatprep.mubr.bf16.mxu0 0
  %1093 = vmatmul.mubr.bf16.gmra.mrb[0].mxu0 %v860
  %v1094 = vpop.f32.mrb[0].mxu0
  %v1095 = vadd.f32 %v769, %v1094
  %v1096 = vpop.f32.mrb[0].mxu0
  %v1097 = vpop.f32.mrb[0].mxu0
  %v1098 = vadd.f32 %v769, %v1097
  %v1099 = vpop.f32.mrb[0].mxu0
  %1100 = vmatprep.mubr.bf16.mxu0 0
  %1101 = vmatmul.mubr.bf16.gmra.mrb[0].mxu0 %v863
  %v1102 = vpop.f32.mrb[0].mxu0
  %v1103 = vadd.f32 %v769, %v1102
  %v1104 = vpop.f32.mrb[0].mxu0
  %v1105 = vpop.f32.mrb[0].mxu0
  %v1106 = vadd.f32 %v769, %v1105
  %v1107 = vpop.f32.mrb[0].mxu0
  %1108 = vmatprep.mubr.bf16.mxu0 0
  %1109 = vmatmul.mubr.bf16.gmra.mrb[0].mxu0 %v866
  %v1110 = vpop.f32.mrb[0].mxu0
  %v1111 = vadd.f32 %v769, %v1110
  %v1112 = vpop.f32.mrb[0].mxu0
  %v1113 = vpop.f32.mrb[0].mxu0
  %v1114 = vadd.f32 %v769, %v1113
  %v1115 = vpop.f32.mrb[0].mxu0
  %1116 = vmatprep.mubr.bf16.mxu0 0
  %1117 = vmatmul.mubr.bf16.gmra.mrb[0].mxu0 %v869
  %v1118 = vpop.f32.mrb[0].mxu0
  %v1119 = vadd.f32 %v769, %v1118
  %v1120 = vpop.f32.mrb[0].mxu0
  %v1121 = vpop.f32.mrb[0].mxu0
  %v1122 = vadd.f32 %v769, %v1121
  %v1123 = vpop.f32.mrb[0].mxu0
  %1124 = vmatprep.mubr.bf16.mxu0 0
  %1125 = vmatmul.mubr.bf16.gmra.mrb[0].mxu0 %v872
  %v1126 = vpop.f32.mrb[0].mxu0
  %v1127 = vadd.f32 %v769, %v1126
  %v1128 = vpop.f32.mrb[0].mxu0
  %v1129 = vpop.f32.mrb[0].mxu0
  %v1130 = vadd.f32 %v769, %v1129
  %v1131 = vpop.f32.mrb[0].mxu0
  %1132 = vmatprep.mubr.bf16.mxu0 0
  %1133 = vmatmul.mubr.bf16.gmra.mrb[0].mxu0 %v875
  %v1134 = vpop.f32.mrb[0].mxu0
  %v1135 = vadd.f32 %v769, %v1134
  %v1136 = vpop.f32.mrb[0].mxu0
  %v1137 = vpop.f32.mrb[0].mxu0
  %v1138 = vadd.f32 %v769, %v1137
  %v1139 = vpop.f32.mrb[0].mxu0
  %1140 = vmatprep.mubr.bf16.mxu0 0
  %1141 = vmatmul.mubr.bf16.gmra.mrb[0].mxu0 %v878
  %v1142 = vpop.f32.mrb[0].mxu0
  %v1143 = vadd.f32 %v769, %v1142
  %v1144 = vpop.f32.mrb[0].mxu0
  %v1145 = vpop.f32.mrb[0].mxu0
  %v1146 = vadd.f32 %v769, %v1145
  %v1147 = vpop.f32.mrb[0].mxu0
  %1148 = vmatprep.mubr.bf16.mxu0 0
  %1149 = vmatmul.mubr.bf16.gmra.mrb[0].mxu0 %v881
  %v1150 = vpop.f32.mrb[0].mxu0
  %v1151 = vadd.f32 %v769, %v1150
  %v1152 = vpop.f32.mrb[0].mxu0
  %v1153 = vpop.f32.mrb[0].mxu0
  %v1154 = vadd.f32 %v769, %v1153
  %v1155 = vpop.f32.mrb[0].mxu0
  %1156 = vmatprep.mubr.bf16.mxu0 0
  %1157 = vmatmul.mubr.bf16.gmra.mrb[0].mxu0 %v884
  %v1158 = vpop.f32.mrb[0].mxu0
  %v1159 = vadd.f32 %v769, %v1158
  %v1160 = vpop.f32.mrb[0].mxu0
  %v1161 = vpop.f32.mrb[0].mxu0
  %v1162 = vadd.f32 %v769, %v1161
  %v1163 = vpop.f32.mrb[0].mxu0
  %1164 = vmatprep.mubr.bf16.mxu0 0
  %1165 = vmatmul.mubr.bf16.gmra.mrb[0].mxu0 %v887
  %v1166 = vpop.f32.mrb[0].mxu0
  %v1167 = vadd.f32 %v769, %v1166
  %v1168 = vpop.f32.mrb[0].mxu0
  %v1169 = vpop.f32.mrb[0].mxu0
  %v1170 = vadd.f32 %v769, %v1169
  %v1171 = vpop.f32.mrb[0].mxu0
  %1172 = vmatprep.mubr.bf16.mxu0 0
  %1173 = vmatmul.mubr.bf16.gmra.mrb[0].mxu0 %v890
  %v1174 = vpop.f32.mrb[0].mxu0
  %v1175 = vadd.f32 %v769, %v1174
  %v1176 = vpop.f32.mrb[0].mxu0
  %v1177 = vpop.f32.mrb[0].mxu0
  %v1178 = vadd.f32 %v769, %v1177
  %v1179 = vpop.f32.mrb[0].mxu0
  %1180 = vdwg.mxu0
  %v1181 = vtanh.pop %v927
  %v1182 = vtanh.pop %v930
  %v1183 = vtanh.pop %v935
  %v1184 = vtanh.pop %v938
  %v1185 = vtanh.pop %v943
  %v1186 = vtanh.pop %v946
  %v1187 = vtanh.pop %v951
  %v1188 = vtanh.pop %v954
  %v1189 = vtanh.pop %v959
  %v1190 = vtanh.pop %v962
  %v1191 = vtanh.pop %v967
  %v1192 = vtanh.pop %v970
  %v1193 = vtanh.pop %v975
  %v1194 = vtanh.pop %v978
  %v1195 = vtanh.pop %v983
  %v1196 = vtanh.pop %v986
  %v1197 = vtanh.pop %v991
  %v1198 = vtanh.pop %v994
  %v1199 = vtanh.pop %v999
  %v1200 = vtanh.pop %v1002
  %v1201 = vtanh.pop %v1007
  %v1202 = vtanh.pop %v1010
  %v1203 = vtanh.pop %v1015
  %v1204 = vtanh.pop %v1018
  %v1205 = vtanh.pop %v1023
  %v1206 = vtanh.pop %v1026
  %v1207 = vtanh.pop %v1031
  %v1208 = vtanh.pop %v1034
  %v1209 = vtanh.pop %v1039
  %v1210 = vtanh.pop %v1042
  %v1211 = vtanh.pop %v1047
  %v1212 = vtanh.pop %v1050
  %v1213 = vtanh.pop %v1055
  %v1214 = vtanh.pop %v1058
  %v1215 = vtanh.pop %v1063
  %v1216 = vtanh.pop %v1066
  %v1217 = vtanh.pop %v1071
  %v1218 = vtanh.pop %v1074
  %v1219 = vtanh.pop %v1079
  %v1220 = vtanh.pop %v1082
  %v1221 = vtanh.pop %v1087
  %v1222 = vtanh.pop %v1090
  %v1223 = vtanh.pop %v1095
  %v1224 = vtanh.pop %v1098
  %v1225 = vtanh.pop %v1103
  %v1226 = vtanh.pop %v1106
  %v1227 = vtanh.pop %v1111
  %v1228 = vtanh.pop %v1114
  %v1229 = vtanh.pop %v1119
  %v1230 = vtanh.pop %v1122
  %v1231 = vtanh.pop %v1127
  %v1232 = vtanh.pop %v1130
  %v1233 = vtanh.pop %v1135
  %v1234 = vtanh.pop %v1138
  %v1235 = vtanh.pop %v1143
  %v1236 = vtanh.pop %v1146
  %v1237 = vtanh.pop %v1151
  %v1238 = vtanh.pop %v1154
  %v1239 = vtanh.pop %v1159
  %v1240 = vtanh.pop %v1162
  %v1241 = vtanh.pop %v1167
  %v1242 = vtanh.pop %v1170
  %v1243 = vtanh.pop %v1175
  %v1244 = vtanh.pop %v1178
  %v1245 = vpack.c.bf16 %v1182, %v1181
  %v1246 = vpack.c.bf16 %v1184, %v1183
  %v1247 = vpack.c.bf16 %v1186, %v1185
  %v1248 = vpack.c.bf16 %v1188, %v1187
  %v1249 = vpack.c.bf16 %v1190, %v1189
  %v1250 = vpack.c.bf16 %v1192, %v1191
  %v1251 = vpack.c.bf16 %v1194, %v1193
  %v1252 = vpack.c.bf16 %v1196, %v1195
  %v1253 = vpack.c.bf16 %v1198, %v1197
  %v1254 = vpack.c.bf16 %v1200, %v1199
  %v1255 = vpack.c.bf16 %v1202, %v1201
  %v1256 = vpack.c.bf16 %v1204, %v1203
  %v1257 = vpack.c.bf16 %v1206, %v1205
  %v1258 = vpack.c.bf16 %v1208, %v1207
  %v1259 = vpack.c.bf16 %v1210, %v1209
  %v1260 = vpack.c.bf16 %v1212, %v1211
  %v1261 = vpack.c.bf16 %v1214, %v1213
  %v1262 = vpack.c.bf16 %v1216, %v1215
  %v1263 = vpack.c.bf16 %v1218, %v1217
  %v1264 = vpack.c.bf16 %v1220, %v1219
  %v1265 = vpack.c.bf16 %v1222, %v1221
  %v1266 = vpack.c.bf16 %v1224, %v1223
  %v1267 = vpack.c.bf16 %v1226, %v1225
  %v1268 = vpack.c.bf16 %v1228, %v1227
  %v1269 = vpack.c.bf16 %v1230, %v1229
  %v1270 = vpack.c.bf16 %v1232, %v1231
  %v1271 = vpack.c.bf16 %v1234, %v1233
  %v1272 = vpack.c.bf16 %v1236, %v1235
  %v1273 = vpack.c.bf16 %v1238, %v1237
  %v1274 = vpack.c.bf16 %v1240, %v1239
  %v1275 = vpack.c.bf16 %v1242, %v1241
  %v1276 = vpack.c.bf16 %v1244, %v1243
  %v1277 = vld [vmem:[%s5] sm:$0xf]
  %v1278 = vld [vmem:[%s5 + $0x4] sm:$0xf]
  %v1279 = vld [vmem:[%s5 + $0x8] sm:$0xf]
  %v1280 = vld [vmem:[%s5 + $0xc] sm:$0xf]
  %v1281 = vld [vmem:[%s6] sm:$0x1]
  %v1283 = vlaneseq
  %v1284 = vshrl.u32 %v1283, 7
  %v1285 = vsub.s32 0, %v1284
  %v1286 = vrot.slane %v1281, %v1285
  %v1292 = vunpack.c.l.b16 %v1277
  %v1293 = vunpack.c.l.b16 %v1278
  %v1294 = vunpack.c.l.b16 %v1279
  %v1295 = vunpack.c.l.b16 %v1280
  %v1296 = vpack.c.b16 %v1293, %v1292
  %v1297 = vpack.c.b16 %v1295, %v1294
  %v1301 = vsel %vm274, %v1245, 0
  %v1304 = vsel %vm274, %v1246, 0
  %v1307 = vsel %vm274, %v1247, 0
  %v1310 = vsel %vm274, %v1248, 0
  %v1313 = vsel %vm274, %v1249, 0
  %v1316 = vsel %vm274, %v1250, 0
  %v1319 = vsel %vm274, %v1251, 0
  %v1322 = vsel %vm274, %v1252, 0
  %v1325 = vsel %vm274, %v1253, 0
  %v1328 = vsel %vm274, %v1254, 0
  %v1331 = vsel %vm274, %v1255, 0
  %v1334 = vsel %vm274, %v1256, 0
  %v1337 = vsel %vm274, %v1257, 0
  %v1340 = vsel %vm274, %v1258, 0
  %v1343 = vsel %vm274, %v1259, 0
  %v1346 = vsel %vm274, %v1260, 0
  %v1349 = vsel %vm274, %v1261, 0
  %v1352 = vsel %vm274, %v1262, 0
  %v1355 = vsel %vm274, %v1263, 0
  %v1358 = vsel %vm274, %v1264, 0
  %v1361 = vsel %vm274, %v1265, 0
  %v1364 = vsel %vm274, %v1266, 0
  %v1367 = vsel %vm274, %v1267, 0
  %v1370 = vsel %vm274, %v1268, 0
  %v1373 = vsel %vm274, %v1269, 0
  %v1376 = vsel %vm274, %v1270, 0
  %v1379 = vsel %vm274, %v1271, 0
  %v1382 = vsel %vm274, %v1272, 0
  %v1385 = vsel %vm274, %v1273, 0
  %v1388 = vsel %vm274, %v1274, 0
  %v1391 = vsel %vm274, %v1275, 0
  %v1394 = vsel %vm274, %v1276, 0
  %1396 = vmatprep.subr.bf16.mxu0 0
  %1397 = vmatpush1.bf16.msra.mxu0 %v1296
  %1398 = vmatprep.subr.bf16.mxu0 0
  %1399 = vmatpush1.bf16.msra.mxu0 %v1297
  %1400 = vmatprep.subr.bf16.mxu0 0
  %1401 = vmatpush1.bf16.msra.mxu0 0
  %1402 = vmatprep.subr.bf16.mxu0 0
  %1403 = vmatpush1.bf16.msra.mxu0 0
  %1404 = vmatprep.subr.bf16.mxu0 0
  %1405 = vmatpush1.bf16.msra.mxu0 0
  %1406 = vmatprep.subr.bf16.mxu0 0
  %1407 = vmatpush1.bf16.msra.mxu0 0
  %1408 = vmatprep.subr.bf16.mxu0 0
  %1409 = vmatpush1.bf16.msra.mxu0 0
  %1410 = vmatprep.subr.bf16.mxu0 0
  %1411 = vmatpush1.bf16.msra.mxu0 0
  %1412 = vmatprep.subr.bf16.mxu0 0
  %1413 = vmatpush1.bf16.msra.mxu0 0
  %1414 = vmatprep.subr.bf16.mxu0 0
  %1415 = vmatpush1.bf16.msra.mxu0 0
  %1416 = vmatprep.subr.bf16.mxu0 0
  %1417 = vmatpush1.bf16.msra.mxu0 0
  %1418 = vmatprep.subr.bf16.mxu0 0
  %1419 = vmatpush1.bf16.msra.mxu0 0
  %1420 = vmatprep.subr.bf16.mxu0 0
  %1421 = vmatpush1.bf16.msra.mxu0 0
  %1422 = vmatprep.subr.bf16.mxu0 0
  %1423 = vmatpush1.bf16.msra.mxu0 0
  %1424 = vmatprep.subr.bf16.mxu0 0
  %1425 = vmatpush1.bf16.msra.mxu0 0
  %1426 = vmatprep.subr.bf16.mxu0 0
  %1427 = vmatpush1.bf16.msra.mxu0 0
  %1428 = vmatprep.mubr.bf16.mxu0 0
  %1429 = vmatmul.mubr.bf16.gmra.mrb[0].mxu0 %v1301
  %v1430 = vpop.f32.mrb[0].mxu0
  %v1431 = vadd.f32 %v1286, %v1430
  %v1432 = vpop.f32.mrb[0].mxu0
  %v1433 = vpop.f32.mrb[0].mxu0
  %v1434 = vadd.f32 %v1286, %v1433
  %v1435 = vpop.f32.mrb[0].mxu0
  %1436 = vmatprep.mubr.bf16.mxu0 0
  %1437 = vmatmul.mubr.bf16.gmra.mrb[0].mxu0 %v1304
  %v1438 = vpop.f32.mrb[0].mxu0
  %v1439 = vadd.f32 %v1286, %v1438
  %v1440 = vpop.f32.mrb[0].mxu0
  %v1441 = vpop.f32.mrb[0].mxu0
  %v1442 = vadd.f32 %v1286, %v1441
  %v1443 = vpop.f32.mrb[0].mxu0
  %1444 = vmatprep.mubr.bf16.mxu0 0
  %1445 = vmatmul.mubr.bf16.gmra.mrb[0].mxu0 %v1307
  %v1446 = vpop.f32.mrb[0].mxu0
  %v1447 = vadd.f32 %v1286, %v1446
  %v1448 = vpop.f32.mrb[0].mxu0
  %v1449 = vpop.f32.mrb[0].mxu0
  %v1450 = vadd.f32 %v1286, %v1449
  %v1451 = vpop.f32.mrb[0].mxu0
  %1452 = vmatprep.mubr.bf16.mxu0 0
  %1453 = vmatmul.mubr.bf16.gmra.mrb[0].mxu0 %v1310
  %v1454 = vpop.f32.mrb[0].mxu0
  %v1455 = vadd.f32 %v1286, %v1454
  %v1456 = vpop.f32.mrb[0].mxu0
  %v1457 = vpop.f32.mrb[0].mxu0
  %v1458 = vadd.f32 %v1286, %v1457
  %v1459 = vpop.f32.mrb[0].mxu0
  %1460 = vmatprep.mubr.bf16.mxu0 0
  %1461 = vmatmul.mubr.bf16.gmra.mrb[0].mxu0 %v1313
  %v1462 = vpop.f32.mrb[0].mxu0
  %v1463 = vadd.f32 %v1286, %v1462
  %v1464 = vpop.f32.mrb[0].mxu0
  %v1465 = vpop.f32.mrb[0].mxu0
  %v1466 = vadd.f32 %v1286, %v1465
  %v1467 = vpop.f32.mrb[0].mxu0
  %1468 = vmatprep.mubr.bf16.mxu0 0
  %1469 = vmatmul.mubr.bf16.gmra.mrb[0].mxu0 %v1316
  %v1470 = vpop.f32.mrb[0].mxu0
  %v1471 = vadd.f32 %v1286, %v1470
  %v1472 = vpop.f32.mrb[0].mxu0
  %v1473 = vpop.f32.mrb[0].mxu0
  %v1474 = vadd.f32 %v1286, %v1473
  %v1475 = vpop.f32.mrb[0].mxu0
  %1476 = vmatprep.mubr.bf16.mxu0 0
  %1477 = vmatmul.mubr.bf16.gmra.mrb[0].mxu0 %v1319
  %v1478 = vpop.f32.mrb[0].mxu0
  %v1479 = vadd.f32 %v1286, %v1478
  %v1480 = vpop.f32.mrb[0].mxu0
  %v1481 = vpop.f32.mrb[0].mxu0
  %v1482 = vadd.f32 %v1286, %v1481
  %v1483 = vpop.f32.mrb[0].mxu0
  %1484 = vmatprep.mubr.bf16.mxu0 0
  %1485 = vmatmul.mubr.bf16.gmra.mrb[0].mxu0 %v1322
  %v1486 = vpop.f32.mrb[0].mxu0
  %v1487 = vadd.f32 %v1286, %v1486
  %v1488 = vpop.f32.mrb[0].mxu0
  %v1489 = vpop.f32.mrb[0].mxu0
  %v1490 = vadd.f32 %v1286, %v1489
  %v1491 = vpop.f32.mrb[0].mxu0
  %1492 = vmatprep.mubr.bf16.mxu0 0
  %1493 = vmatmul.mubr.bf16.gmra.mrb[0].mxu0 %v1325
  %v1494 = vpop.f32.mrb[0].mxu0
  %v1495 = vadd.f32 %v1286, %v1494
  %v1496 = vpop.f32.mrb[0].mxu0
  %v1497 = vpop.f32.mrb[0].mxu0
  %v1498 = vadd.f32 %v1286, %v1497
  %v1499 = vpop.f32.mrb[0].mxu0
  %1500 = vmatprep.mubr.bf16.mxu0 0
  %1501 = vmatmul.mubr.bf16.gmra.mrb[0].mxu0 %v1328
  %v1502 = vpop.f32.mrb[0].mxu0
  %v1503 = vadd.f32 %v1286, %v1502
  %v1504 = vpop.f32.mrb[0].mxu0
  %v1505 = vpop.f32.mrb[0].mxu0
  %v1506 = vadd.f32 %v1286, %v1505
  %v1507 = vpop.f32.mrb[0].mxu0
  %1508 = vmatprep.mubr.bf16.mxu0 0
  %1509 = vmatmul.mubr.bf16.gmra.mrb[0].mxu0 %v1331
  %v1510 = vpop.f32.mrb[0].mxu0
  %v1511 = vadd.f32 %v1286, %v1510
  %v1512 = vpop.f32.mrb[0].mxu0
  %v1513 = vpop.f32.mrb[0].mxu0
  %v1514 = vadd.f32 %v1286, %v1513
  %v1515 = vpop.f32.mrb[0].mxu0
  %1516 = vmatprep.mubr.bf16.mxu0 0
  %1517 = vmatmul.mubr.bf16.gmra.mrb[0].mxu0 %v1334
  %v1518 = vpop.f32.mrb[0].mxu0
  %v1519 = vadd.f32 %v1286, %v1518
  %v1520 = vpop.f32.mrb[0].mxu0
  %v1521 = vpop.f32.mrb[0].mxu0
  %v1522 = vadd.f32 %v1286, %v1521
  %v1523 = vpop.f32.mrb[0].mxu0
  %1524 = vmatprep.mubr.bf16.mxu0 0
  %1525 = vmatmul.mubr.bf16.gmra.mrb[0].mxu0 %v1337
  %v1526 = vpop.f32.mrb[0].mxu0
  %v1527 = vadd.f32 %v1286, %v1526
  %v1528 = vpop.f32.mrb[0].mxu0
  %v1529 = vpop.f32.mrb[0].mxu0
  %v1530 = vadd.f32 %v1286, %v1529
  %v1531 = vpop.f32.mrb[0].mxu0
  %1532 = vmatprep.mubr.bf16.mxu0 0
  %1533 = vmatmul.mubr.bf16.gmra.mrb[0].mxu0 %v1340
  %v1534 = vpop.f32.mrb[0].mxu0
  %v1535 = vadd.f32 %v1286, %v1534
  %v1536 = vpop.f32.mrb[0].mxu0
  %v1537 = vpop.f32.mrb[0].mxu0
  %v1538 = vadd.f32 %v1286, %v1537
  %v1539 = vpop.f32.mrb[0].mxu0
  %1540 = vmatprep.mubr.bf16.mxu0 0
  %1541 = vmatmul.mubr.bf16.gmra.mrb[0].mxu0 %v1343
  %v1542 = vpop.f32.mrb[0].mxu0
  %v1543 = vadd.f32 %v1286, %v1542
  %v1544 = vpop.f32.mrb[0].mxu0
  %v1545 = vpop.f32.mrb[0].mxu0
  %v1546 = vadd.f32 %v1286, %v1545
  %v1547 = vpop.f32.mrb[0].mxu0
  %1548 = vmatprep.mubr.bf16.mxu0 0
  %1549 = vmatmul.mubr.bf16.gmra.mrb[0].mxu0 %v1346
  %v1550 = vpop.f32.mrb[0].mxu0
  %v1551 = vadd.f32 %v1286, %v1550
  %v1552 = vpop.f32.mrb[0].mxu0
  %v1553 = vpop.f32.mrb[0].mxu0
  %v1554 = vadd.f32 %v1286, %v1553
  %v1555 = vpop.f32.mrb[0].mxu0
  %1556 = vmatprep.mubr.bf16.mxu0 0
  %1557 = vmatmul.mubr.bf16.gmra.mrb[0].mxu0 %v1349
  %v1558 = vpop.f32.mrb[0].mxu0
  %v1559 = vadd.f32 %v1286, %v1558
  %v1560 = vpop.f32.mrb[0].mxu0
  %v1561 = vpop.f32.mrb[0].mxu0
  %v1562 = vadd.f32 %v1286, %v1561
  %v1563 = vpop.f32.mrb[0].mxu0
  %1564 = vmatprep.mubr.bf16.mxu0 0
  %1565 = vmatmul.mubr.bf16.gmra.mrb[0].mxu0 %v1352
  %v1566 = vpop.f32.mrb[0].mxu0
  %v1567 = vadd.f32 %v1286, %v1566
  %v1568 = vpop.f32.mrb[0].mxu0
  %v1569 = vpop.f32.mrb[0].mxu0
  %v1570 = vadd.f32 %v1286, %v1569
  %v1571 = vpop.f32.mrb[0].mxu0
  %1572 = vmatprep.mubr.bf16.mxu0 0
  %1573 = vmatmul.mubr.bf16.gmra.mrb[0].mxu0 %v1355
  %v1574 = vpop.f32.mrb[0].mxu0
  %v1575 = vadd.f32 %v1286, %v1574
  %v1576 = vpop.f32.mrb[0].mxu0
  %v1577 = vpop.f32.mrb[0].mxu0
  %v1578 = vadd.f32 %v1286, %v1577
  %v1579 = vpop.f32.mrb[0].mxu0
  %1580 = vmatprep.mubr.bf16.mxu0 0
  %1581 = vmatmul.mubr.bf16.gmra.mrb[0].mxu0 %v1358
  %v1582 = vpop.f32.mrb[0].mxu0
  %v1583 = vadd.f32 %v1286, %v1582
  %v1584 = vpop.f32.mrb[0].mxu0
  %v1585 = vpop.f32.mrb[0].mxu0
  %v1586 = vadd.f32 %v1286, %v1585
  %v1587 = vpop.f32.mrb[0].mxu0
  %1588 = vmatprep.mubr.bf16.mxu0 0
  %1589 = vmatmul.mubr.bf16.gmra.mrb[0].mxu0 %v1361
  %v1590 = vpop.f32.mrb[0].mxu0
  %v1591 = vadd.f32 %v1286, %v1590
  %v1592 = vpop.f32.mrb[0].mxu0
  %v1593 = vpop.f32.mrb[0].mxu0
  %v1594 = vadd.f32 %v1286, %v1593
  %v1595 = vpop.f32.mrb[0].mxu0
  %1596 = vmatprep.mubr.bf16.mxu0 0
  %1597 = vmatmul.mubr.bf16.gmra.mrb[0].mxu0 %v1364
  %v1598 = vpop.f32.mrb[0].mxu0
  %v1599 = vadd.f32 %v1286, %v1598
  %v1600 = vpop.f32.mrb[0].mxu0
  %v1601 = vpop.f32.mrb[0].mxu0
  %v1602 = vadd.f32 %v1286, %v1601
  %v1603 = vpop.f32.mrb[0].mxu0
  %1604 = vmatprep.mubr.bf16.mxu0 0
  %1605 = vmatmul.mubr.bf16.gmra.mrb[0].mxu0 %v1367
  %v1606 = vpop.f32.mrb[0].mxu0
  %v1607 = vadd.f32 %v1286, %v1606
  %v1608 = vpop.f32.mrb[0].mxu0
  %v1609 = vpop.f32.mrb[0].mxu0
  %v1610 = vadd.f32 %v1286, %v1609
  %v1611 = vpop.f32.mrb[0].mxu0
  %1612 = vmatprep.mubr.bf16.mxu0 0
  %1613 = vmatmul.mubr.bf16.gmra.mrb[0].mxu0 %v1370
  %v1614 = vpop.f32.mrb[0].mxu0
  %v1615 = vadd.f32 %v1286, %v1614
  %v1616 = vpop.f32.mrb[0].mxu0
  %v1617 = vpop.f32.mrb[0].mxu0
  %v1618 = vadd.f32 %v1286, %v1617
  %v1619 = vpop.f32.mrb[0].mxu0
  %1620 = vmatprep.mubr.bf16.mxu0 0
  %1621 = vmatmul.mubr.bf16.gmra.mrb[0].mxu0 %v1373
  %v1622 = vpop.f32.mrb[0].mxu0
  %v1623 = vadd.f32 %v1286, %v1622
  %v1624 = vpop.f32.mrb[0].mxu0
  %v1625 = vpop.f32.mrb[0].mxu0
  %v1626 = vadd.f32 %v1286, %v1625
  %v1627 = vpop.f32.mrb[0].mxu0
  %1628 = vmatprep.mubr.bf16.mxu0 0
  %1629 = vmatmul.mubr.bf16.gmra.mrb[0].mxu0 %v1376
  %v1630 = vpop.f32.mrb[0].mxu0
  %v1631 = vadd.f32 %v1286, %v1630
  %v1632 = vpop.f32.mrb[0].mxu0
  %v1633 = vpop.f32.mrb[0].mxu0
  %v1634 = vadd.f32 %v1286, %v1633
  %v1635 = vpop.f32.mrb[0].mxu0
  %1636 = vmatprep.mubr.bf16.mxu0 0
  %1637 = vmatmul.mubr.bf16.gmra.mrb[0].mxu0 %v1379
  %v1638 = vpop.f32.mrb[0].mxu0
  %v1639 = vadd.f32 %v1286, %v1638
  %v1640 = vpop.f32.mrb[0].mxu0
  %v1641 = vpop.f32.mrb[0].mxu0
  %v1642 = vadd.f32 %v1286, %v1641
  %v1643 = vpop.f32.mrb[0].mxu0
  %1644 = vmatprep.mubr.bf16.mxu0 0
  %1645 = vmatmul.mubr.bf16.gmra.mrb[0].mxu0 %v1382
  %v1646 = vpop.f32.mrb[0].mxu0
  %v1647 = vadd.f32 %v1286, %v1646
  %v1648 = vpop.f32.mrb[0].mxu0
  %v1649 = vpop.f32.mrb[0].mxu0
  %v1650 = vadd.f32 %v1286, %v1649
  %v1651 = vpop.f32.mrb[0].mxu0
  %1652 = vmatprep.mubr.bf16.mxu0 0
  %1653 = vmatmul.mubr.bf16.gmra.mrb[0].mxu0 %v1385
  %v1654 = vpop.f32.mrb[0].mxu0
  %v1655 = vadd.f32 %v1286, %v1654
  %v1656 = vpop.f32.mrb[0].mxu0
  %v1657 = vpop.f32.mrb[0].mxu0
  %v1658 = vadd.f32 %v1286, %v1657
  %v1659 = vpop.f32.mrb[0].mxu0
  %1660 = vmatprep.mubr.bf16.mxu0 0
  %1661 = vmatmul.mubr.bf16.gmra.mrb[0].mxu0 %v1388
  %v1662 = vpop.f32.mrb[0].mxu0
  %v1663 = vadd.f32 %v1286, %v1662
  %v1664 = vpop.f32.mrb[0].mxu0
  %v1665 = vpop.f32.mrb[0].mxu0
  %v1666 = vadd.f32 %v1286, %v1665
  %v1667 = vpop.f32.mrb[0].mxu0
  %1668 = vmatprep.mubr.bf16.mxu0 0
  %1669 = vmatmul.mubr.bf16.gmra.mrb[0].mxu0 %v1391
  %v1670 = vpop.f32.mrb[0].mxu0
  %v1671 = vadd.f32 %v1286, %v1670
  %v1672 = vpop.f32.mrb[0].mxu0
  %v1673 = vpop.f32.mrb[0].mxu0
  %v1674 = vadd.f32 %v1286, %v1673
  %v1675 = vpop.f32.mrb[0].mxu0
  %1676 = vmatprep.mubr.bf16.mxu0 0
  %1677 = vmatmul.mubr.bf16.gmra.mrb[0].mxu0 %v1394
  %v1678 = vpop.f32.mrb[0].mxu0
  %v1679 = vadd.f32 %v1286, %v1678
  %v1680 = vpop.f32.mrb[0].mxu0
  %v1681 = vpop.f32.mrb[0].mxu0
  %v1682 = vadd.f32 %v1286, %v1681
  %v1683 = vpop.f32.mrb[0].mxu0
  %1684 = vdwg.mxu0
  %vm1685 = vcmask 130048
  %1686 = vst.msk [vmem:[%s7] sm:$0xff] %vm1685, %v1431
  %1687 = vst.msk [vmem:[%s7 + $0x8] sm:$0xff] %vm1685, %v1434
  %1688 = vst.msk [vmem:[%s7 + $0x10] sm:$0xff] %vm1685, %v1439
  %1689 = vst.msk [vmem:[%s7 + $0x18] sm:$0xff] %vm1685, %v1442
  %1690 = vst.msk [vmem:[%s7 + $0x20] sm:$0xff] %vm1685, %v1447
  %1691 = vst.msk [vmem:[%s7 + $0x28] sm:$0xff] %vm1685, %v1450
  %1692 = vst.msk [vmem:[%s7 + $0x30] sm:$0xff] %vm1685, %v1455
  %1693 = vst.msk [vmem:[%s7 + $0x38] sm:$0xff] %vm1685, %v1458
  %1694 = vst.msk [vmem:[%s7 + $0x40] sm:$0xff] %vm1685, %v1463
  %1695 = vst.msk [vmem:[%s7 + $0x48] sm:$0xff] %vm1685, %v1466
  %1696 = vst.msk [vmem:[%s7 + $0x50] sm:$0xff] %vm1685, %v1471
  %1697 = vst.msk [vmem:[%s7 + $0x58] sm:$0xff] %vm1685, %v1474
  %1698 = vst.msk [vmem:[%s7 + $0x60] sm:$0xff] %vm1685, %v1479
  %1699 = vst.msk [vmem:[%s7 + $0x68] sm:$0xff] %vm1685, %v1482
  %1700 = vst.msk [vmem:[%s7 + $0x70] sm:$0xff] %vm1685, %v1487
  %1701 = vst.msk [vmem:[%s7 + $0x78] sm:$0xff] %vm1685, %v1490
  %1702 = vst.msk [vmem:[%s7 + $0x80] sm:$0xff] %vm1685, %v1495
  %1703 = vst.msk [vmem:[%s7 + $0x88] sm:$0xff] %vm1685, %v1498
  %1704 = vst.msk [vmem:[%s7 + $0x90] sm:$0xff] %vm1685, %v1503
  %1705 = vst.msk [vmem:[%s7 + $0x98] sm:$0xff] %vm1685, %v1506
  %1706 = vst.msk [vmem:[%s7 + $0xa0] sm:$0xff] %vm1685, %v1511
  %1707 = vst.msk [vmem:[%s7 + $0xa8] sm:$0xff] %vm1685, %v1514
  %1708 = vst.msk [vmem:[%s7 + $0xb0] sm:$0xff] %vm1685, %v1519
  %1709 = vst.msk [vmem:[%s7 + $0xb8] sm:$0xff] %vm1685, %v1522
  %1710 = vst.msk [vmem:[%s7 + $0xc0] sm:$0xff] %vm1685, %v1527
  %1711 = vst.msk [vmem:[%s7 + $0xc8] sm:$0xff] %vm1685, %v1530
  %1712 = vst.msk [vmem:[%s7 + $0xd0] sm:$0xff] %vm1685, %v1535
  %1713 = vst.msk [vmem:[%s7 + $0xd8] sm:$0xff] %vm1685, %v1538
  %1714 = vst.msk [vmem:[%s7 + $0xe0] sm:$0xff] %vm1685, %v1543
  %1715 = vst.msk [vmem:[%s7 + $0xe8] sm:$0xff] %vm1685, %v1546
  %1716 = vst.msk [vmem:[%s7 + $0xf0] sm:$0xff] %vm1685, %v1551
  %1717 = vst.msk [vmem:[%s7 + $0xf8] sm:$0xff] %vm1685, %v1554
  %1718 = vst.msk [vmem:[%s7 + $0x100] sm:$0xff] %vm1685, %v1559
  %1719 = vst.msk [vmem:[%s7 + $0x108] sm:$0xff] %vm1685, %v1562
  %1720 = vst.msk [vmem:[%s7 + $0x110] sm:$0xff] %vm1685, %v1567
  %1721 = vst.msk [vmem:[%s7 + $0x118] sm:$0xff] %vm1685, %v1570
  %1722 = vst.msk [vmem:[%s7 + $0x120] sm:$0xff] %vm1685, %v1575
  %1723 = vst.msk [vmem:[%s7 + $0x128] sm:$0xff] %vm1685, %v1578
  %1724 = vst.msk [vmem:[%s7 + $0x130] sm:$0xff] %vm1685, %v1583
  %1725 = vst.msk [vmem:[%s7 + $0x138] sm:$0xff] %vm1685, %v1586
  %1726 = vst.msk [vmem:[%s7 + $0x140] sm:$0xff] %vm1685, %v1591
  %1727 = vst.msk [vmem:[%s7 + $0x148] sm:$0xff] %vm1685, %v1594
  %1728 = vst.msk [vmem:[%s7 + $0x150] sm:$0xff] %vm1685, %v1599
  %1729 = vst.msk [vmem:[%s7 + $0x158] sm:$0xff] %vm1685, %v1602
  %1730 = vst.msk [vmem:[%s7 + $0x160] sm:$0xff] %vm1685, %v1607
  %1731 = vst.msk [vmem:[%s7 + $0x168] sm:$0xff] %vm1685, %v1610
  %1732 = vst.msk [vmem:[%s7 + $0x170] sm:$0xff] %vm1685, %v1615
  %1733 = vst.msk [vmem:[%s7 + $0x178] sm:$0xff] %vm1685, %v1618
  %1734 = vst.msk [vmem:[%s7 + $0x180] sm:$0xff] %vm1685, %v1623
  %1735 = vst.msk [vmem:[%s7 + $0x188] sm:$0xff] %vm1685, %v1626
  %1736 = vst.msk [vmem:[%s7 + $0x190] sm:$0xff] %vm1685, %v1631
  %1737 = vst.msk [vmem:[%s7 + $0x198] sm:$0xff] %vm1685, %v1634
  %1738 = vst.msk [vmem:[%s7 + $0x1a0] sm:$0xff] %vm1685, %v1639
  %1739 = vst.msk [vmem:[%s7 + $0x1a8] sm:$0xff] %vm1685, %v1642
  %1740 = vst.msk [vmem:[%s7 + $0x1b0] sm:$0xff] %vm1685, %v1647
  %1741 = vst.msk [vmem:[%s7 + $0x1b8] sm:$0xff] %vm1685, %v1650
  %1742 = vst.msk [vmem:[%s7 + $0x1c0] sm:$0xff] %vm1685, %v1655
  %1743 = vst.msk [vmem:[%s7 + $0x1c8] sm:$0xff] %vm1685, %v1658
  %1744 = vst.msk [vmem:[%s7 + $0x1d0] sm:$0xff] %vm1685, %v1663
  %1745 = vst.msk [vmem:[%s7 + $0x1d8] sm:$0xff] %vm1685, %v1666
  %1746 = vst.msk [vmem:[%s7 + $0x1e0] sm:$0xff] %vm1685, %v1671
  %1747 = vst.msk [vmem:[%s7 + $0x1e8] sm:$0xff] %vm1685, %v1674
  %1748 = vst.msk [vmem:[%s7 + $0x1f0] sm:$0xff] %vm1685, %v1679
  %1749 = vst.msk [vmem:[%s7 + $0x1f8] sm:$0xff] %vm1685, %v1682
  // Predicated region
  $region30: #{mlp_forward.1} parent=0 // pred_check
    _
  $region31: #{mlp_forward.1} parent=0 // pred_check_branch
    %1751 = sbr.rel (0) target = $region33
  $region32: #{mlp_forward.1} parent=0 // pred_region
    _
  $region33: #{mlp_forward.1} parent=0 // pred_fallthru
    _
  // Predicated region
  $region34: #{mlp_forward.1} parent=0 // pred_check
    _
  $region35: #{mlp_forward.1} parent=0 // pred_check_branch
    %1753 = sbr.rel (0) target = $region37
  $region36: #{mlp_forward.1} parent=0 // pred_region
    _
  $region37: #{mlp_forward.1} parent=0 // pred_fallthru
    _

</llo_original>
